<compile_context>
chip_gen: v5e
topology: v5e:2x2
jax: 0.10.0
libtpu: 0.0.40
codegen_flags: <defaults>
</compile_context>

<pallas_src>
import math
from functools import partial

import jax
import jax.numpy as jnp
from jax.experimental import pallas as pl
from jax.experimental.pallas import tpu as pltpu


def _layer_norm(x, g, b, eps=1e-5):
    mu = jnp.mean(x, axis=-1, keepdims=True)
    xc = x - mu
    var = jnp.mean(xc * xc, axis=-1, keepdims=True)
    return xc * jax.lax.rsqrt(var + eps) * g + b


def _encoder_kernel(B, S, D, H, NF,
                    emb_ref, hmask_ref,
                    wqkv_ref, bqkv_ref, wo_ref, bo_ref,
                    g1_ref, be1_ref,
                    w1_ref, b1_ref, w2_ref, b2_ref,
                    g2_ref, be2_ref,
                    out_ref,
                    xs, ffacc):
    """Grid = (layer, FFN chunk).  Inner step 0 also runs the attention block."""
    Dh = D // H
    scale = 1.0 / math.sqrt(Dh)
    l = pl.program_id(0)
    j = pl.program_id(1)

    # Load the embedded sequence into the carried scratch at the very start.
    @pl.when((l == 0) & (j == 0))
    def _():
        xs[...] = emb_ref[...].reshape(B * S, D)

    # ---------- self-attention + norm1 (first inner step of each layer) ----------
    @pl.when(j == 0)
    def _():
        x = xs[...]                                               # (B*S, D) f32
        qkv = jnp.dot(x.astype(jnp.bfloat16), wqkv_ref[0],
                      preferred_element_type=jnp.float32) + bqkv_ref[0]

        # Lane-aligned 128-wide slices; lane dim stays D=128 throughout.
        q = qkv[:, :D].reshape(B, S, D)
        k = qkv[:, D:2 * D].reshape(B, 1, S, D)
        v = qkv[:, 2 * D:].reshape(B, 1, S, D)

        hmask = hmask_ref[...].reshape(1, H, 1, D)                # 0/1, f32
        # Head-major masked expansion: row h*S+kt holds head-h features of
        # key/value token kt (all other lanes zero).  Sublane broadcast only.
        k_exp = (k * hmask).reshape(B, H * S, D).astype(jnp.bfloat16)
        v_exp = (v * hmask).reshape(B, H * S, D).astype(jnp.bfloat16)

        # Per-head scores via masked full-D contraction; column c = h*S + kt.
        s = jnp.einsum('bqd,bcd->bqc', q.astype(jnp.bfloat16), k_exp,
                       preferred_element_type=jnp.float32) * scale   # (B,S,H*S)

        # Per-(query, head) softmax over key tokens (tiny 4 KiB tensor).
        s4 = s.reshape(B, S, H, S)
        s4 = s4 - jnp.max(s4, axis=-1, keepdims=True)
        p4 = jnp.exp(s4)
        p4 = p4 * pl.reciprocal(jnp.sum(p4, axis=-1, keepdims=True), approx=True)
        p = p4.reshape(B, S, H * S).astype(jnp.bfloat16)

        # Context: masked v_exp means output lane d only picks up head d//Dh,
        # which is exactly the per-head concat of the reference.
        ctx = jnp.einsum('bqc,bcd->bqd', p, v_exp,
                         preferred_element_type=jnp.float32).reshape(B * S, D)
        attn = jnp.dot(ctx.astype(jnp.bfloat16), wo_ref[0],
                       preferred_element_type=jnp.float32) + bo_ref[0]

        xs[...] = _layer_norm(x + attn, g1_ref[0], be1_ref[0])   # norm1(x + sa(x))
        ffacc[...] = jnp.zeros_like(ffacc)

    # ---------- feed-forward chunk j (accumulated across the inner axis) ----------
    x1 = xs[...]                                                  # post-norm1
    h1 = jnp.maximum(
        jnp.dot(x1.astype(jnp.bfloat16), w1_ref[0],
                preferred_element_type=jnp.float32) + b1_ref[0], 0.0)
    ffacc[...] += jnp.dot(h1.astype(jnp.bfloat16), w2_ref[0],
                          preferred_element_type=jnp.float32)

    # ---------- finalize layer ----------
    @pl.when(j == NF - 1)
    def _():
        xs[...] = _layer_norm(x1 + ffacc[...] + b2_ref[0],
                              g2_ref[0], be2_ref[0])              # norm2(x + ff(x))

    @pl.when((j == NF - 1) & (l == pl.num_programs(0) - 1))
    def _():
        out_ref[...] = xs[...].reshape(B, S, D)[:, 0, :]          # res[:, 0, :]


def transformer_encoder(emb, params, nhead):
    """emb: (B, S, D) float32; returns (B, D) float32."""
    B, S, D = emb.shape
    L = params['wqkv'].shape[0]
    F = params['w1'].shape[-1]
    H = nhead
    Dh = D // H

    TF = 512 if F % 512 == 0 else F          # FFN chunk width (inner grid axis)
    NF = F // TF

    # Layer-invariant 0/1 head mask (H, D): mask[h, d] = 1 iff d // Dh == h.
    hmask = (jnp.arange(D, dtype=jnp.int32)[None, :] // Dh
             == jnp.arange(H, dtype=jnp.int32)[:, None]).astype(jnp.float32)

    kernel = partial(_encoder_kernel, B, S, D, H, NF)

    grid_spec = pltpu.PrefetchScalarGridSpec(
        num_scalar_prefetch=0,
        grid=(L, NF),
        in_specs=[
            pl.BlockSpec((B, S, D), lambda l, j: (0, 0, 0)),       # emb (resident)
            pl.BlockSpec((H, D), lambda l, j: (0, 0)),             # head mask
            pl.BlockSpec((1, D, 3 * D), lambda l, j: (l, 0, 0)),   # wqkv (bf16)
            pl.BlockSpec((1, 1, 3 * D), lambda l, j: (l, 0, 0)),   # bqkv
            pl.BlockSpec((1, D, D), lambda l, j: (l, 0, 0)),       # wo   (bf16)
            pl.BlockSpec((1, 1, D), lambda l, j: (l, 0, 0)),       # bo
            pl.BlockSpec((1, 1, D), lambda l, j: (l, 0, 0)),       # ln1 gamma
            pl.BlockSpec((1, 1, D), lambda l, j: (l, 0, 0)),       # ln1 beta
            pl.BlockSpec((1, D, TF), lambda l, j: (l, 0, j)),      # w1 chunk (bf16)
            pl.BlockSpec((1, 1, TF), lambda l, j: (l, 0, j)),      # b1 chunk
            pl.BlockSpec((1, TF, D), lambda l, j: (l, j, 0)),      # w2 chunk (bf16)
            pl.BlockSpec((1, 1, D), lambda l, j: (l, 0, 0)),       # b2
            pl.BlockSpec((1, 1, D), lambda l, j: (l, 0, 0)),       # ln2 gamma
            pl.BlockSpec((1, 1, D), lambda l, j: (l, 0, 0)),       # ln2 beta
        ],
        out_specs=pl.BlockSpec((B, D), lambda l, j: (0, 0)),
        scratch_shapes=[pltpu.VMEM((B * S, D), jnp.float32),       # layer carry
                        pltpu.VMEM((B * S, D), jnp.float32)],      # FFN accumulator
    )

    return pl.pallas_call(
        kernel,
        out_shape=jax.ShapeDtypeStruct((B, D), jnp.float32),
        grid_spec=grid_spec,
        compiler_params=pltpu.CompilerParams(
            dimension_semantics=("arbitrary", "arbitrary"),
            vmem_limit_bytes=32 << 20,
        ),
    )(emb, hmask,
      params['wqkv'], params['bqkv'], params['wo'], params['bo'],
      params['g1'], params['be1'],
      params['w1'], params['b1'], params['w2'], params['b2'],
      params['g2'], params['be2'])


@partial(jax.jit, static_argnames=("nhead",))
def entity_represent_forward(entity_sequence, params, *, nhead):
    """Full EntityRepresentModel.forward (embedding gather + cls write fused by jit)."""
    emb = params['embedding'][entity_sequence]               # (B, S, D)
    emb = emb.at[:, 0, :].set(params['cls'])                 # emb[:, 0, :] = cls
    return transformer_encoder(emb.astype(jnp.float32), params, nhead)


def init_params(key, vocab, D, L, F):
    ks = jax.random.split(key, 8)
    scale = 0.05
    bf16 = jnp.bfloat16
    return {
        'embedding': jax.random.normal(ks[0], (vocab, D), jnp.float32),
        'cls': jax.random.normal(ks[1], (D,), jnp.float32),
        # weight matrices streamed as bf16 (f32 accumulation in-kernel)
        'wqkv': (scale * jax.random.normal(ks[2], (L, D, 3 * D), jnp.float32)).astype(bf16),
        'bqkv': jnp.zeros((L, 1, 3 * D), jnp.float32),
        'wo': (scale * jax.random.normal(ks[3], (L, D, D), jnp.float32)).astype(bf16),
        'bo': jnp.zeros((L, 1, D), jnp.float32),
        'g1': jnp.ones((L, 1, D), jnp.float32),
        'be1': jnp.zeros((L, 1, D), jnp.float32),
        'w1': (scale * jax.random.normal(ks[4], (L, D, F), jnp.float32)).astype(bf16),
        'b1': jnp.zeros((L, 1, F), jnp.float32),
        'w2': (scale * jax.random.normal(ks[5], (L, F, D), jnp.float32)).astype(bf16),
        'b2': jnp.zeros((L, 1, D), jnp.float32),
        'g2': jnp.ones((L, 1, D), jnp.float32),
        'be2': jnp.zeros((L, 1, D), jnp.float32),
    }


if __name__ == "__main__":
    # small shapes consistent with the module:
    #  entity_vec_dim = 128, nhead = 8 (default), layer_num = 2 (ctor arg),
    #  dim_feedforward = 2048 (PyTorch TransformerEncoderLayer default)
    B, S = 2, 8
    VOCAB, D, H, L, F = 16, 128, 8, 2, 2048

    key = jax.random.PRNGKey(0)
    k_par, k_seq = jax.random.split(key)
    params = init_params(k_par, VOCAB, D, L, F)
    entity_sequence = jax.random.randint(k_seq, (B, S), 0, VOCAB, dtype=jnp.int32)

    out = entity_represent_forward(entity_sequence, params, nhead=H)
    out = jax.block_until_ready(out)
    assert out.shape == (B, D) and out.dtype == jnp.float32
    assert bool(jnp.all(jnp.isfinite(out)))
    print("KERNEL_OK")
</pallas_src>

<mosaic_0001>
module attributes {stable_mosaic.version = 11 : i64} {
  func.func @_encoder_kernel(%arg0: i32, %arg1: i32, %arg2: memref<2x8x128xf32, #tpu.memory_space<vmem>>, %arg3: memref<8x128xf32, #tpu.memory_space<vmem>>, %arg4: memref<1x128x384xbf16, #tpu.memory_space<vmem>>, %arg5: memref<1x1x384xf32, #tpu.memory_space<vmem>>, %arg6: memref<1x128x128xbf16, #tpu.memory_space<vmem>>, %arg7: memref<1x1x128xf32, #tpu.memory_space<vmem>>, %arg8: memref<1x1x128xf32, #tpu.memory_space<vmem>>, %arg9: memref<1x1x128xf32, #tpu.memory_space<vmem>>, %arg10: memref<1x128x512xbf16, #tpu.memory_space<vmem>>, %arg11: memref<1x1x512xf32, #tpu.memory_space<vmem>>, %arg12: memref<1x512x128xbf16, #tpu.memory_space<vmem>>, %arg13: memref<1x1x128xf32, #tpu.memory_space<vmem>>, %arg14: memref<1x1x128xf32, #tpu.memory_space<vmem>>, %arg15: memref<1x1x128xf32, #tpu.memory_space<vmem>>, %arg16: memref<2x128xf32, #tpu.memory_space<vmem>>, %arg17: memref<16x128xf32, #tpu.memory_space<vmem>>, %arg18: memref<16x128xf32, #tpu.memory_space<vmem>>) attributes {dimension_semantics = [#tpu.dimension_semantics<arbitrary>, #tpu.dimension_semantics<arbitrary>], iteration_bounds = array<i64: 2, 4>, scalar_prefetch = 0 : i64, scratch_operands = 2 : i64, tpu.core_type = #tpu.core_type<tc>, window_params = [{pipeline_mode = #tpu.pipeline_mode<synchronous>, transform_indices = @transform_0, window_bounds = array<i64: 2, 8, 128>}, {pipeline_mode = #tpu.pipeline_mode<synchronous>, transform_indices = @transform_1, window_bounds = array<i64: 8, 128>}, {transform_indices = @transform_2, window_bounds = array<i64: 1, 128, 384>}, {transform_indices = @transform_3, window_bounds = array<i64: 1, 1, 384>}, {transform_indices = @transform_4, window_bounds = array<i64: 1, 128, 128>}, {transform_indices = @transform_5, window_bounds = array<i64: 1, 1, 128>}, {transform_indices = @transform_6, window_bounds = array<i64: 1, 1, 128>}, {transform_indices = @transform_7, window_bounds = array<i64: 1, 1, 128>}, {transform_indices = @transform_8, window_bounds = array<i64: 1, 128, 512>}, {transform_indices = @transform_9, window_bounds = array<i64: 1, 1, 512>}, {transform_indices = @transform_10, window_bounds = array<i64: 1, 512, 128>}, {transform_indices = @transform_11, window_bounds = array<i64: 1, 1, 128>}, {transform_indices = @transform_12, window_bounds = array<i64: 1, 1, 128>}, {transform_indices = @transform_13, window_bounds = array<i64: 1, 1, 128>}, {pipeline_mode = #tpu.pipeline_mode<synchronous>, transform_indices = @transform_14, window_bounds = array<i64: 2, 128>}]} {
    %c0_i32 = arith.constant 0 : i32
    %0 = arith.cmpi eq, %arg0, %c0_i32 : i32
    %c0_i32_0 = arith.constant 0 : i32
    %1 = arith.cmpi eq, %arg1, %c0_i32_0 : i32
    %2 = arith.andi %0, %1 : i1
    %3 = arith.extui %2 : i1 to i32
    %c0_i32_1 = arith.constant 0 : i32
    %4 = arith.cmpi ne, %3, %c0_i32_1 : i32
    scf.if %4 {
      %c0_23 = arith.constant 0 : index
      %c0_24 = arith.constant 0 : index
      %c0_25 = arith.constant 0 : index
      %34 = vector.load %arg2[%c0_23, %c0_24, %c0_25] : memref<2x8x128xf32, #tpu.memory_space<vmem>>, vector<2x8x128xf32>
      %35 = vector.shape_cast %34 : vector<2x8x128xf32> to vector<16x128xf32>
      %c0_26 = arith.constant 0 : index
      %c0_27 = arith.constant 0 : index
      %36 = vector.load %arg17[%c0_26, %c0_27] : memref<16x128xf32, #tpu.memory_space<vmem>>, vector<16x128xf32>
      tpu.vector_store %arg17[%c0_26, %c0_27], %35 {strides = array<i32>} : memref<16x128xf32, #tpu.memory_space<vmem>>, vector<16x128xf32>,
    } else {
    }
    %c0_i32_2 = arith.constant 0 : i32
    %5 = arith.cmpi eq, %arg1, %c0_i32_2 : i32
    %6 = arith.extui %5 : i1 to i32
    %c0_i32_3 = arith.constant 0 : i32
    %7 = arith.cmpi ne, %6, %c0_i32_3 : i32
    scf.if %7 {
      %c0_23 = arith.constant 0 : index
      %c0_24 = arith.constant 0 : index
      %34 = vector.load %arg17[%c0_23, %c0_24] : memref<16x128xf32, #tpu.memory_space<vmem>>, vector<16x128xf32>
      %35 = arith.truncf %34 : vector<16x128xf32> to vector<16x128xbf16>
      %c0_25 = arith.constant 0 : index
      %c0_26 = arith.constant 0 : index
      %c0_27 = arith.constant 0 : index
      %36 = vector.load %arg4[%c0_25, %c0_26, %c0_27] : memref<1x128x384xbf16, #tpu.memory_space<vmem>>, vector<1x128x384xbf16>
      %37 = vector.shape_cast %36 : vector<1x128x384xbf16> to vector<128x384xbf16>
      %cst_28 = arith.constant dense<0.000000e+00> : vector<16x384xf32>
      %38 = tpu.matmul %35, %37, %cst_28 {dimension_numbers = #tpu.dot_dimension_numbers<[1], [0], [0], [1], [0, 0, 1, 1], [], []>} : vector<16x128xbf16>, vector<128x384xbf16>, vector<16x384xf32> -> vector<16x384xf32>
      %c0_29 = arith.constant 0 : index
      %c0_30 = arith.constant 0 : index
      %c0_31 = arith.constant 0 : index
      %39 = vector.load %arg5[%c0_29, %c0_30, %c0_31] : memref<1x1x384xf32, #tpu.memory_space<vmem>>, vector<1x1x384xf32>
      %40 = vector.shape_cast %39 : vector<1x1x384xf32> to vector<1x384xf32>
      %41 = vector.broadcast %40 : vector<1x384xf32> to vector<16x384xf32>
      %42 = arith.addf %38, %41 : vector<16x384xf32>
      %43 = vector.extract_strided_slice %42 {offsets = [0, 0], sizes = [16, 128], strides = [1, 1]} : vector<16x384xf32> to vector<16x128xf32>
      %44 = vector.shape_cast %43 : vector<16x128xf32> to vector<2x8x128xf32>
      %45 = vector.extract_strided_slice %42 {offsets = [0, 128], sizes = [16, 128], strides = [1, 1]} : vector<16x384xf32> to vector<16x128xf32>
      %46 = vector.shape_cast %45 : vector<16x128xf32> to vector<2x1x8x128xf32>
      %47 = vector.extract_strided_slice %42 {offsets = [0, 256], sizes = [16, 128], strides = [1, 1]} : vector<16x384xf32> to vector<16x128xf32>
      %48 = vector.shape_cast %47 : vector<16x128xf32> to vector<2x1x8x128xf32>
      %c0_32 = arith.constant 0 : index
      %c0_33 = arith.constant 0 : index
      %49 = vector.load %arg3[%c0_32, %c0_33] : memref<8x128xf32, #tpu.memory_space<vmem>>, vector<8x128xf32>
      %50 = vector.shape_cast %49 : vector<8x128xf32> to vector<1x8x1x128xf32>
      %51 = vector.broadcast %46 : vector<2x1x8x128xf32> to vector<2x8x8x128xf32>
      %52 = vector.broadcast %50 : vector<1x8x1x128xf32> to vector<2x8x8x128xf32>
      %53 = arith.mulf %51, %52 : vector<2x8x8x128xf32>
      %54 = vector.shape_cast %53 : vector<2x8x8x128xf32> to vector<2x64x128xf32>
      %55 = arith.truncf %54 : vector<2x64x128xf32> to vector<2x64x128xbf16>
      %56 = vector.broadcast %48 : vector<2x1x8x128xf32> to vector<2x8x8x128xf32>
      %57 = vector.broadcast %50 : vector<1x8x1x128xf32> to vector<2x8x8x128xf32>
      %58 = arith.mulf %56, %57 : vector<2x8x8x128xf32>
      %59 = vector.shape_cast %58 : vector<2x8x8x128xf32> to vector<2x64x128xf32>
      %60 = arith.truncf %59 : vector<2x64x128xf32> to vector<2x64x128xbf16>
      %61 = arith.truncf %44 : vector<2x8x128xf32> to vector<2x8x128xbf16>
      "tpu.trace_start"() <{level = 10 : i32, message = "bqd,bcd->bqc"}> : () -> ()
      %cst_34 = arith.constant dense<0.000000e+00> : vector<2x8x64xf32>
      %62 = tpu.matmul %61, %55, %cst_34 {dimension_numbers = #tpu.dot_dimension_numbers<[2], [2], [1], [1], [0, 0, 0, 1, 1, 1], [0], [0]>} : vector<2x8x128xbf16>, vector<2x64x128xbf16>, vector<2x8x64xf32> -> vector<2x8x64xf32>
      "tpu.trace_stop"() : () -> ()
      %cst_35 = arith.constant 2.500000e-01 : f32
      %63 = vector.broadcast %cst_35 : f32 to vector<2x8x64xf32>
      %64 = arith.mulf %62, %63 : vector<2x8x64xf32>
      %65 = vector.shape_cast %64 : vector<2x8x64xf32> to vector<2x8x8x8xf32>
      %cst_36 = arith.constant dense<0xFF800000> : vector<2x8x8xf32>
      %66 = vector.multi_reduction <maximumf>, %65, %cst_36 [3] : vector<2x8x8x8xf32> to vector<2x8x8xf32>
      %67 = vector.shape_cast %66 : vector<2x8x8xf32> to vector<2x8x8x1xf32>
      %68 = vector.broadcast %67 : vector<2x8x8x1xf32> to vector<2x8x8x8xf32>
      %69 = arith.subf %65, %68 : vector<2x8x8x8xf32>
      %70 = math.exp %69 : vector<2x8x8x8xf32>
      %cst_37 = arith.constant dense<0.000000e+00> : vector<2x8x8xf32>
      %71 = vector.multi_reduction <add>, %70, %cst_37 [3] : vector<2x8x8x8xf32> to vector<2x8x8xf32>
      %72 = vector.shape_cast %71 : vector<2x8x8xf32> to vector<2x8x8x1xf32>
      %73 = tpu.reciprocal %72 {approx = true} : vector<2x8x8x1xf32> -> vector<2x8x8x1xf32>
      %74 = vector.broadcast %73 : vector<2x8x8x1xf32> to vector<2x8x8x8xf32>
      %75 = arith.mulf %70, %74 : vector<2x8x8x8xf32>
      %76 = vector.shape_cast %75 : vector<2x8x8x8xf32> to vector<2x8x64xf32>
      %77 = arith.truncf %76 : vector<2x8x64xf32> to vector<2x8x64xbf16>
      "tpu.trace_start"() <{level = 10 : i32, message = "bqc,bcd->bqd"}> : () -> ()
      %cst_38 = arith.constant dense<0.000000e+00> : vector<2x8x128xf32>
      %78 = tpu.matmul %77, %60, %cst_38 {dimension_numbers = #tpu.dot_dimension_numbers<[2], [1], [1], [2], [0, 0, 0, 1, 1, 2], [0], [0]>} : vector<2x8x64xbf16>, vector<2x64x128xbf16>, vector<2x8x128xf32> -> vector<2x8x128xf32>
      "tpu.trace_stop"() : () -> ()
      %79 = vector.shape_cast %78 : vector<2x8x128xf32> to vector<16x128xf32>
      %80 = arith.truncf %79 : vector<16x128xf32> to vector<16x128xbf16>
      %c0_39 = arith.constant 0 : index
      %c0_40 = arith.constant 0 : index
      %c0_41 = arith.constant 0 : index
      %81 = vector.load %arg6[%c0_39, %c0_40, %c0_41] : memref<1x128x128xbf16, #tpu.memory_space<vmem>>, vector<1x128x128xbf16>
      %82 = vector.shape_cast %81 : vector<1x128x128xbf16> to vector<128x128xbf16>
      %cst_42 = arith.constant dense<0.000000e+00> : vector<16x128xf32>
      %83 = tpu.matmul %80, %82, %cst_42 {dimension_numbers = #tpu.dot_dimension_numbers<[1], [0], [0], [1], [0, 0, 1, 1], [], []>} : vector<16x128xbf16>, vector<128x128xbf16>, vector<16x128xf32> -> vector<16x128xf32>
      %c0_43 = arith.constant 0 : index
      %c0_44 = arith.constant 0 : index
      %c0_45 = arith.constant 0 : index
      %84 = vector.load %arg7[%c0_43, %c0_44, %c0_45] : memref<1x1x128xf32, #tpu.memory_space<vmem>>, vector<1x1x128xf32>
      %85 = vector.shape_cast %84 : vector<1x1x128xf32> to vector<1x128xf32>
      %86 = vector.broadcast %85 : vector<1x128xf32> to vector<16x128xf32>
      %87 = arith.addf %83, %86 : vector<16x128xf32>
      %88 = arith.addf %34, %87 : vector<16x128xf32>
      %c0_46 = arith.constant 0 : index
      %c0_47 = arith.constant 0 : index
      %c0_48 = arith.constant 0 : index
      %89 = vector.load %arg8[%c0_46, %c0_47, %c0_48] : memref<1x1x128xf32, #tpu.memory_space<vmem>>, vector<1x1x128xf32>
      %90 = vector.shape_cast %89 : vector<1x1x128xf32> to vector<1x128xf32>
      %c0_49 = arith.constant 0 : index
      %c0_50 = arith.constant 0 : index
      %c0_51 = arith.constant 0 : index
      %91 = vector.load %arg9[%c0_49, %c0_50, %c0_51] : memref<1x1x128xf32, #tpu.memory_space<vmem>>, vector<1x1x128xf32>
      %92 = vector.shape_cast %91 : vector<1x1x128xf32> to vector<1x128xf32>
      %cst_52 = arith.constant dense<0.000000e+00> : vector<16xf32>
      %93 = vector.multi_reduction <add>, %88, %cst_52 [1] : vector<16x128xf32> to vector<16xf32>
      %94 = vector.shape_cast %93 : vector<16xf32> to vector<16x1xf32>
      %cst_53 = arith.constant 1.280000e+02 : f32
      %95 = vector.broadcast %cst_53 : f32 to vector<16x1xf32>
      %96 = arith.divf %94, %95 : vector<16x1xf32>
      %97 = vector.broadcast %96 : vector<16x1xf32> to vector<16x128xf32>
      %98 = arith.subf %88, %97 : vector<16x128xf32>
      %99 = arith.mulf %98, %98 : vector<16x128xf32>
      %cst_54 = arith.constant dense<0.000000e+00> : vector<16xf32>
      %100 = vector.multi_reduction <add>, %99, %cst_54 [1] : vector<16x128xf32> to vector<16xf32>
      %101 = vector.shape_cast %100 : vector<16xf32> to vector<16x1xf32>
      %cst_55 = arith.constant 1.280000e+02 : f32
      %102 = vector.broadcast %cst_55 : f32 to vector<16x1xf32>
      %103 = arith.divf %101, %102 : vector<16x1xf32>
      %cst_56 = arith.constant 9.99999974E-6 : f32
      %104 = vector.broadcast %cst_56 : f32 to vector<16x1xf32>
      %105 = arith.addf %103, %104 : vector<16x1xf32>
      %106 = math.rsqrt %105 : vector<16x1xf32>
      %107 = vector.broadcast %106 : vector<16x1xf32> to vector<16x128xf32>
      %108 = arith.mulf %98, %107 : vector<16x128xf32>
      %109 = vector.broadcast %90 : vector<1x128xf32> to vector<16x128xf32>
      %110 = arith.mulf %108, %109 : vector<16x128xf32>
      %111 = vector.broadcast %92 : vector<1x128xf32> to vector<16x128xf32>
      %112 = arith.addf %110, %111 : vector<16x128xf32>
      %c0_57 = arith.constant 0 : index
      %c0_58 = arith.constant 0 : index
      %113 = vector.load %arg17[%c0_57, %c0_58] : memref<16x128xf32, #tpu.memory_space<vmem>>, vector<16x128xf32>
      tpu.vector_store %arg17[%c0_57, %c0_58], %112 {strides = array<i32>} : memref<16x128xf32, #tpu.memory_space<vmem>>, vector<16x128xf32>,
      %cst_59 = arith.constant 0.000000e+00 : f32
      %114 = vector.broadcast %cst_59 : f32 to vector<16x128xf32>
      %c0_60 = arith.constant 0 : index
      %c0_61 = arith.constant 0 : index
      %115 = vector.load %arg18[%c0_60, %c0_61] : memref<16x128xf32, #tpu.memory_space<vmem>>, vector<16x128xf32>
      tpu.vector_store %arg18[%c0_60, %c0_61], %114 {strides = array<i32>} : memref<16x128xf32, #tpu.memory_space<vmem>>, vector<16x128xf32>,
    } else {
    }
    %c0 = arith.constant 0 : index
    %c0_4 = arith.constant 0 : index
    %8 = vector.load %arg17[%c0, %c0_4] : memref<16x128xf32, #tpu.memory_space<vmem>>, vector<16x128xf32>
    %9 = arith.truncf %8 : vector<16x128xf32> to vector<16x128xbf16>
    %c0_5 = arith.constant 0 : index
    %c0_6 = arith.constant 0 : index
    %c0_7 = arith.constant 0 : index
    %10 = vector.load %arg10[%c0_5, %c0_6, %c0_7] : memref<1x128x512xbf16, #tpu.memory_space<vmem>>, vector<1x128x512xbf16>
    %11 = vector.shape_cast %10 : vector<1x128x512xbf16> to vector<128x512xbf16>
    %cst = arith.constant dense<0.000000e+00> : vector<16x512xf32>
    %12 = tpu.matmul %9, %11, %cst {dimension_numbers = #tpu.dot_dimension_numbers<[1], [0], [0], [1], [0, 0, 1, 1], [], []>} : vector<16x128xbf16>, vector<128x512xbf16>, vector<16x512xf32> -> vector<16x512xf32>
    %c0_8 = arith.constant 0 : index
    %c0_9 = arith.constant 0 : index
    %c0_10 = arith.constant 0 : index
    %13 = vector.load %arg11[%c0_8, %c0_9, %c0_10] : memref<1x1x512xf32, #tpu.memory_space<vmem>>, vector<1x1x512xf32>
    %14 = vector.shape_cast %13 : vector<1x1x512xf32> to vector<1x512xf32>
    %15 = vector.broadcast %14 : vector<1x512xf32> to vector<16x512xf32>
    %16 = arith.addf %12, %15 : vector<16x512xf32>
    %cst_11 = arith.constant 0.000000e+00 : f32
    %17 = vector.broadcast %cst_11 : f32 to vector<16x512xf32>
    %18 = arith.maximumf %16, %17 : vector<16x512xf32>
    %c0_12 = arith.constant 0 : index
    %c0_13 = arith.constant 0 : index
    %19 = vector.load %arg18[%c0_12, %c0_13] : memref<16x128xf32, #tpu.memory_space<vmem>>, vector<16x128xf32>
    %20 = arith.truncf %18 : vector<16x512xf32> to vector<16x512xbf16>
    %c0_14 = arith.constant 0 : index
    %c0_15 = arith.constant 0 : index
    %c0_16 = arith.constant 0 : index
    %21 = vector.load %arg12[%c0_14, %c0_15, %c0_16] : memref<1x512x128xbf16, #tpu.memory_space<vmem>>, vector<1x512x128xbf16>
    %22 = vector.shape_cast %21 : vector<1x512x128xbf16> to vector<512x128xbf16>
    %cst_17 = arith.constant dense<0.000000e+00> : vector<16x128xf32>
    %23 = tpu.matmul %20, %22, %cst_17 {dimension_numbers = #tpu.dot_dimension_numbers<[1], [0], [0], [1], [0, 0, 1, 1], [], []>} : vector<16x512xbf16>, vector<512x128xbf16>, vector<16x128xf32> -> vector<16x128xf32>
    %24 = arith.addf %19, %23 : vector<16x128xf32>
    %c0_18 = arith.constant 0 : index
    %c0_19 = arith.constant 0 : index
    %25 = vector.load %arg18[%c0_18, %c0_19] : memref<16x128xf32, #tpu.memory_space<vmem>>, vector<16x128xf32>
    tpu.vector_store %arg18[%c0_18, %c0_19], %24 {strides = array<i32>} : memref<16x128xf32, #tpu.memory_space<vmem>>, vector<16x128xf32>,
    %c3_i32 = arith.constant 3 : i32
    %26 = arith.cmpi eq, %arg1, %c3_i32 : i32
    %27 = arith.extui %26 : i1 to i32
    %c0_i32_20 = arith.constant 0 : i32
    %28 = arith.cmpi ne, %27, %c0_i32_20 : i32
    scf.if %28 {
      %c0_23 = arith.constant 0 : index
      %c0_24 = arith.constant 0 : index
      %34 = vector.load %arg18[%c0_23, %c0_24] : memref<16x128xf32, #tpu.memory_space<vmem>>, vector<16x128xf32>
      %35 = arith.addf %8, %34 : vector<16x128xf32>
      %c0_25 = arith.constant 0 : index
      %c0_26 = arith.constant 0 : index
      %c0_27 = arith.constant 0 : index
      %36 = vector.load %arg13[%c0_25, %c0_26, %c0_27] : memref<1x1x128xf32, #tpu.memory_space<vmem>>, vector<1x1x128xf32>
      %37 = vector.shape_cast %36 : vector<1x1x128xf32> to vector<1x128xf32>
      %38 = vector.broadcast %37 : vector<1x128xf32> to vector<16x128xf32>
      %39 = arith.addf %35, %38 : vector<16x128xf32>
      %c0_28 = arith.constant 0 : index
      %c0_29 = arith.constant 0 : index
      %c0_30 = arith.constant 0 : index
      %40 = vector.load %arg14[%c0_28, %c0_29, %c0_30] : memref<1x1x128xf32, #tpu.memory_space<vmem>>, vector<1x1x128xf32>
      %41 = vector.shape_cast %40 : vector<1x1x128xf32> to vector<1x128xf32>
      %c0_31 = arith.constant 0 : index
      %c0_32 = arith.constant 0 : index
      %c0_33 = arith.constant 0 : index
      %42 = vector.load %arg15[%c0_31, %c0_32, %c0_33] : memref<1x1x128xf32, #tpu.memory_space<vmem>>, vector<1x1x128xf32>
      %43 = vector.shape_cast %42 : vector<1x1x128xf32> to vector<1x128xf32>
      %cst_34 = arith.constant dense<0.000000e+00> : vector<16xf32>
      %44 = vector.multi_reduction <add>, %39, %cst_34 [1] : vector<16x128xf32> to vector<16xf32>
      %45 = vector.shape_cast %44 : vector<16xf32> to vector<16x1xf32>
      %cst_35 = arith.constant 1.280000e+02 : f32
      %46 = vector.broadcast %cst_35 : f32 to vector<16x1xf32>
      %47 = arith.divf %45, %46 : vector<16x1xf32>
      %48 = vector.broadcast %47 : vector<16x1xf32> to vector<16x128xf32>
      %49 = arith.subf %39, %48 : vector<16x128xf32>
      %50 = arith.mulf %49, %49 : vector<16x128xf32>
      %cst_36 = arith.constant dense<0.000000e+00> : vector<16xf32>
      %51 = vector.multi_reduction <add>, %50, %cst_36 [1] : vector<16x128xf32> to vector<16xf32>
      %52 = vector.shape_cast %51 : vector<16xf32> to vector<16x1xf32>
      %cst_37 = arith.constant 1.280000e+02 : f32
      %53 = vector.broadcast %cst_37 : f32 to vector<16x1xf32>
      %54 = arith.divf %52, %53 : vector<16x1xf32>
      %cst_38 = arith.constant 9.99999974E-6 : f32
      %55 = vector.broadcast %cst_38 : f32 to vector<16x1xf32>
      %56 = arith.addf %54, %55 : vector<16x1xf32>
      %57 = math.rsqrt %56 : vector<16x1xf32>
      %58 = vector.broadcast %57 : vector<16x1xf32> to vector<16x128xf32>
      %59 = arith.mulf %49, %58 : vector<16x128xf32>
      %60 = vector.broadcast %41 : vector<1x128xf32> to vector<16x128xf32>
      %61 = arith.mulf %59, %60 : vector<16x128xf32>
      %62 = vector.broadcast %43 : vector<1x128xf32> to vector<16x128xf32>
      %63 = arith.addf %61, %62 : vector<16x128xf32>
      %c0_39 = arith.constant 0 : index
      %c0_40 = arith.constant 0 : index
      %64 = vector.load %arg17[%c0_39, %c0_40] : memref<16x128xf32, #tpu.memory_space<vmem>>, vector<16x128xf32>
      tpu.vector_store %arg17[%c0_39, %c0_40], %63 {strides = array<i32>} : memref<16x128xf32, #tpu.memory_space<vmem>>, vector<16x128xf32>,
    } else {
    }
    %c3_i32_21 = arith.constant 3 : i32
    %29 = arith.cmpi eq, %arg1, %c3_i32_21 : i32
    %c1_i32 = arith.constant 1 : i32
    %30 = arith.cmpi eq, %arg0, %c1_i32 : i32
    %31 = arith.andi %29, %30 : i1
    %32 = arith.extui %31 : i1 to i32
    %c0_i32_22 = arith.constant 0 : i32
    %33 = arith.cmpi ne, %32, %c0_i32_22 : i32
    scf.if %33 {
      %c0_23 = arith.constant 0 : index
      %c0_24 = arith.constant 0 : index
      %34 = vector.load %arg17[%c0_23, %c0_24] : memref<16x128xf32, #tpu.memory_space<vmem>>, vector<16x128xf32>
      %35 = vector.shape_cast %34 : vector<16x128xf32> to vector<2x8x128xf32>
      %36 = vector.extract_strided_slice %35 {offsets = [0, 0, 0], sizes = [2, 1, 128], strides = [1, 1, 1]} : vector<2x8x128xf32> to vector<2x1x128xf32>
      %37 = vector.shape_cast %36 : vector<2x1x128xf32> to vector<2x128xf32>
      %c0_25 = arith.constant 0 : index
      %c0_26 = arith.constant 0 : index
      %38 = vector.load %arg16[%c0_25, %c0_26] : memref<2x128xf32, #tpu.memory_space<vmem>>, vector<2x128xf32>
      tpu.vector_store %arg16[%c0_25, %c0_26], %37 {strides = array<i32>} : memref<2x128xf32, #tpu.memory_space<vmem>>, vector<2x128xf32>,
    } else {
    }
    return
  }
  func.func @transform_0(%arg0: i32, %arg1: i32) -> (i32, i32, i32) {
    %c0_i32 = arith.constant 0 : i32
    %c0_i32_0 = arith.constant 0 : i32
    %c0_i32_1 = arith.constant 0 : i32
    %c0_i32_2 = arith.constant 0 : i32
    return %c0_i32, %c0_i32_0, %c0_i32_1 : i32, i32, i32
  }
  func.func @transform_1(%arg0: i32, %arg1: i32) -> (i32, i32) {
    %c0_i32 = arith.constant 0 : i32
    %c0_i32_0 = arith.constant 0 : i32
    %c0_i32_1 = arith.constant 0 : i32
    return %c0_i32, %c0_i32_0 : i32, i32
  }
  func.func @transform_2(%arg0: i32, %arg1: i32) -> (i32, i32, i32) {
    %c0_i32 = arith.constant 0 : i32
    %c0_i32_0 = arith.constant 0 : i32
    %c0_i32_1 = arith.constant 0 : i32
    return %arg0, %c0_i32, %c0_i32_0 : i32, i32, i32
  }
  func.func @transform_3(%arg0: i32, %arg1: i32) -> (i32, i32, i32) {
    %c0_i32 = arith.constant 0 : i32
    %c0_i32_0 = arith.constant 0 : i32
    %c0_i32_1 = arith.constant 0 : i32
    return %arg0, %c0_i32, %c0_i32_0 : i32, i32, i32
  }
  func.func @transform_4(%arg0: i32, %arg1: i32) -> (i32, i32, i32) {
    %c0_i32 = arith.constant 0 : i32
    %c0_i32_0 = arith.constant 0 : i32
    %c0_i32_1 = arith.constant 0 : i32
    return %arg0, %c0_i32, %c0_i32_0 : i32, i32, i32
  }
  func.func @transform_5(%arg0: i32, %arg1: i32) -> (i32, i32, i32) {
    %c0_i32 = arith.constant 0 : i32
    %c0_i32_0 = arith.constant 0 : i32
    %c0_i32_1 = arith.constant 0 : i32
    return %arg0, %c0_i32, %c0_i32_0 : i32, i32, i32
  }
  func.func @transform_6(%arg0: i32, %arg1: i32) -> (i32, i32, i32) {
    %c0_i32 = arith.constant 0 : i32
    %c0_i32_0 = arith.constant 0 : i32
    %c0_i32_1 = arith.constant 0 : i32
    return %arg0, %c0_i32, %c0_i32_0 : i32, i32, i32
  }
  func.func @transform_7(%arg0: i32, %arg1: i32) -> (i32, i32, i32) {
    %c0_i32 = arith.constant 0 : i32
    %c0_i32_0 = arith.constant 0 : i32
    %c0_i32_1 = arith.constant 0 : i32
    return %arg0, %c0_i32, %c0_i32_0 : i32, i32, i32
  }
  func.func @transform_8(%arg0: i32, %arg1: i32) -> (i32, i32, i32) {
    %c0_i32 = arith.constant 0 : i32
    %c0_i32_0 = arith.constant 0 : i32
    return %arg0, %c0_i32, %arg1 : i32, i32, i32
  }
  func.func @transform_9(%arg0: i32, %arg1: i32) -> (i32, i32, i32) {
    %c0_i32 = arith.constant 0 : i32
    %c0_i32_0 = arith.constant 0 : i32
    return %arg0, %c0_i32, %arg1 : i32, i32, i32
  }
  func.func @transform_10(%arg0: i32, %arg1: i32) -> (i32, i32, i32) {
    %c0_i32 = arith.constant 0 : i32
    %c0_i32_0 = arith.constant 0 : i32
    return %arg0, %arg1, %c0_i32 : i32, i32, i32
  }
  func.func @transform_11(%arg0: i32, %arg1: i32) -> (i32, i32, i32) {
    %c0_i32 = arith.constant 0 : i32
    %c0_i32_0 = arith.constant 0 : i32
    %c0_i32_1 = arith.constant 0 : i32
    return %arg0, %c0_i32, %c0_i32_0 : i32, i32, i32
  }
  func.func @transform_12(%arg0: i32, %arg1: i32) -> (i32, i32, i32) {
    %c0_i32 = arith.constant 0 : i32
    %c0_i32_0 = arith.constant 0 : i32
    %c0_i32_1 = arith.constant 0 : i32
    return %arg0, %c0_i32, %c0_i32_0 : i32, i32, i32
  }
  func.func @transform_13(%arg0: i32, %arg1: i32) -> (i32, i32, i32) {
    %c0_i32 = arith.constant 0 : i32
    %c0_i32_0 = arith.constant 0 : i32
    %c0_i32_1 = arith.constant 0 : i32
    return %arg0, %c0_i32, %c0_i32_0 : i32, i32, i32
  }
  func.func @transform_14(%arg0: i32, %arg1: i32) -> (i32, i32) {
    %c0_i32 = arith.constant 0 : i32
    %c0_i32_0 = arith.constant 0 : i32
    %c0_i32_1 = arith.constant 0 : i32
    return %c0_i32, %c0_i32_0 : i32, i32
  }
}

</mosaic_0001>

<llo_original>
// kernel: entity_represent_forward.1
$region0: #{entity_represent_forward.1}
  #allocation0 [shape = 'u32[]', space=smem, size = 0x4, offset = 0x4, fixed_abs, tag = 'smem constant byte address 0x4 - core index']
  #allocation1 [shape = 'u32[72,128]{1,0:T(1,128)}', space=vmem, size = 0x9000, scoped, tag = 'internal scratch']
  #allocation2 [shape = 'f32[16,128]{1,0:T(8,128)}', space=vmem, size = 0x2000, scoped, tag = 'scratch operand']
  #allocation3 [shape = 'f32[16,128]{1,0:T(8,128)}', space=vmem, size = 0x2000, scoped, tag = 'scratch operand']
  %s0 = inlined_call_operand.vmem [shape: f32[2,8,128], index: 0, kind: input, shape index: {}]
  %s1 = inlined_call_operand.vmem [shape: f32[8,128], index: 1, kind: input, shape index: {}]
  %s2 = inlined_call_operand.hbm [shape: bf16[2,128,384], index: 2, kind: input, shape index: {}]
  %s3 = inlined_call_operand.vmem [shape: f32[2,1,384], index: 3, kind: input, shape index: {}]
  %s4 = inlined_call_operand.vmem [shape: bf16[2,128,128], index: 4, kind: input, shape index: {}]
  %s5 = inlined_call_operand.vmem [shape: f32[2,1,128], index: 5, kind: input, shape index: {}]
  %s6 = inlined_call_operand.vmem [shape: f32[2,1,128], index: 6, kind: input, shape index: {}]
  %s7 = inlined_call_operand.vmem [shape: f32[2,1,128], index: 7, kind: input, shape index: {}]
  %s8 = inlined_call_operand.hbm [shape: bf16[2,128,2048], index: 8, kind: input, shape index: {}]
  %s9 = inlined_call_operand.vmem [shape: f32[2,1,2048], index: 9, kind: input, shape index: {}]
  %s10 = inlined_call_operand.hbm [shape: bf16[2,2048,128], index: 10, kind: input, shape index: {}]
  %s11 = inlined_call_operand.vmem [shape: f32[2,1,128], index: 11, kind: input, shape index: {}]
  %s12 = inlined_call_operand.vmem [shape: f32[2,1,128], index: 12, kind: input, shape index: {}]
  %s13 = inlined_call_operand.vmem [shape: f32[2,1,128], index: 13, kind: input, shape index: {}]
  %s14 = inlined_call_operand.hbm [shape: f32[2,128], index: 14, kind: output, shape index: {}]
  %s15 = sld [smem:[#allocation0]]
  $region117: #{entity_represent_forward.1} parent=0
    _
  %s17 = ssub.s32 1, %s15
  %s18 = scalar_select 0, %s17, %s15
  $region1: #{entity_represent_forward.1} parent=0
    #allocation4 [shape = 'u8[196608]{0}', space=vmem, size = 0x30000, scoped, tag = 'input window, operand 2']
    #allocation5 [shape = 's32[2]{0}', space=sflag, size = 0x8, scoped, tag = 'scoped memory for entity_represent_forward.1']
    #allocation6 [shape = 's32[2]{0}', space=sflag, size = 0x8, scoped, tag = 'scoped memory for entity_represent_forward.1']
    #allocation7 [shape = 'u8[262144]{0}', space=vmem, size = 0x40000, scoped, tag = 'input window, operand 8']
    #allocation8 [shape = 's32[2]{0}', space=sflag, size = 0x8, scoped, tag = 'scoped memory for entity_represent_forward.1']
    #allocation9 [shape = 'u8[262144]{0}', space=vmem, size = 0x40000, scoped, tag = 'input window, operand 10']
    #allocation10 [shape = 'u8[1024]{0}', space=vmem, size = 0x400, scoped, tag = 'output window, operand 0, single buffered']
    %19 = vsyncpa [#allocation5], 0
    %s20 = scalar_lea.sflag [#allocation5], 1
    %21 = vsyncpa %s20, 0
    %22 = vsyncpa [#allocation8], 0
    %s23 = scalar_lea.sflag [#allocation8], 1
    %24 = vsyncpa %s23, 0
    %25 = vsyncpa [#allocation6], 0
    loop: start=0, step=1, limit=10
    $region2: #{entity_represent_forward.1} parent=1 // loop_pre_header
      _
    $region3: #{entity_represent_forward.1} parent=1 // loop_header
      %s27 = sphi 0, %s31
      %p28 = scmp.ge.s32.totalorder %s27, 10
      %s34 = sphi 0, %s46
      %s35 = sphi 0, %s42
      %s36 = sphi 0, %s34
      %s37 = sphi 0, %s35
      %s38 = sphi 0, %s36
      %s39 = sphi 0, %s37
      %s47 = sphi 0, %s47
      %s49 = sphi 0, %s47
      %s50 = sphi 0, %s49
      %s64 = sphi 0, %s50
      %s68 = sphi 0, %s68
      %s70 = sphi 0, %s68
      %s71 = sphi 0, %s70
      %s85 = sphi 0, %s71
      %s91 = sphi 0, %s93
      %s94 = sphi 0, %s91
      %s95 = sphi 0, %s94
      %s111 = sphi 0, %s95
      %s117 = sphi 0, %s119
      %s120 = sphi 0, %s117
      %s121 = sphi 0, %s120
      %s137 = sphi 0, %s121
      %s143 = sphi 0, %s145
      %s146 = sphi 0, %s143
      %s147 = sphi 0, %s146
      %s163 = sphi 0, %s147
      %s169 = sphi 0, %s171
      %s172 = sphi 0, %s169
      %s173 = sphi 0, %s172
      %s189 = sphi 0, %s173
      %s195 = sphi 0, %s197
      %s198 = sphi 0, %s195
      %s199 = sphi 0, %s198
      %s215 = sphi 0, %s199
      %s221 = sphi 0, %s223
      %s224 = sphi 0, %s221
      %s225 = sphi 0, %s224
      %s241 = sphi 0, %s225
      %s249 = sphi 0, %s251
      %s252 = sphi 0, %s249
      %s253 = sphi 0, %s252
      %s269 = sphi 0, %s253
      %s277 = sphi 0, %s279
      %s280 = sphi 0, %s277
      %s281 = sphi 0, %s280
      %s297 = sphi 0, %s281
      %s305 = sphi 0, %s307
      %s308 = sphi 0, %s305
      %s309 = sphi 0, %s308
      %s325 = sphi 0, %s309
      %s331 = sphi 0, %s333
      %s334 = sphi 0, %s331
      %s335 = sphi 0, %s334
      %s351 = sphi 0, %s335
      %s357 = sphi 0, %s359
      %s360 = sphi 0, %s357
      %s361 = sphi 0, %s360
      %s377 = sphi 0, %s361
      %s383 = sphi 0, %s385
      %s386 = sphi 0, %s383
      %s387 = sphi 0, %s386
      %s403 = sphi 0, %s387
      %s407 = sphi 0, %s407
      %s409 = sphi 0, %s407
      %s410 = sphi 0, %s409
      %s424 = sphi 0, %s410
    $region4: #{entity_represent_forward.1} parent=1 // loop_header_branch
      %30 = sbr.rel (%p28) target = $region8
    $region5: #{entity_represent_forward.1} parent=1 // loop_body
      %s32 = ssub.s32 %s27, 1
      %s33 = ssub.s32 %s27, 2
      %s40 = sadd.s32 1, %s35
      %p41 = scmp.ge.s32.totalorder %s40, 4
      %s42 = scalar_select %p41, 0, %s40
      %s43 = sadd.s32 1, %s34
      %s44 = scalar_select %p41, %s43, %s34
      %p45 = scmp.ge.s32.totalorder %s44, 2
      %s46 = scalar_select %p45, 0, %s44
      %s48 = sadd.s32 %s47, 1
      %p51 = scmp.eq.s32.totalorder %s27, 7
      %p52 = scmp.ne.s32.totalorder %s47, %s49
      %p53 = scmp.eq.s32.totalorder %s27, 0
      %p54 = por %p52, %p53
      %p55 = scmp.ne.s32.totalorder %s47, %s49
      %p56 = scmp.eq.s32.totalorder %s32, 7
      %p57 = por %p55, %p56
      %p58 = scmp.ne.s32.totalorder %s49, %s50
      %p59 = scmp.eq.s32.totalorder %s32, 0
      %p60 = por %p58, %p59
      %p61 = scmp.ne.s32.totalorder %s49, %s50
      %p62 = scmp.eq.s32.totalorder %s33, 7
      %p63 = por %p61, %p62
      %p65 = scmp.ne.s32.totalorder %s50, %s64
      %p66 = scmp.eq.s32.totalorder %s33, 0
      %p67 = por %p65, %p66
      %s69 = sadd.s32 %s68, 1
      %p72 = scmp.eq.s32.totalorder %s27, 7
      %p73 = scmp.ne.s32.totalorder %s68, %s70
      %p74 = scmp.eq.s32.totalorder %s27, 0
      %p75 = por %p73, %p74
      %p76 = scmp.ne.s32.totalorder %s68, %s70
      %p77 = scmp.eq.s32.totalorder %s32, 7
      %p78 = por %p76, %p77
      %p79 = scmp.ne.s32.totalorder %s70, %s71
      %p80 = scmp.eq.s32.totalorder %s32, 0
      %p81 = por %p79, %p80
      %p82 = scmp.ne.s32.totalorder %s70, %s71
      %p83 = scmp.eq.s32.totalorder %s33, 7
      %p84 = por %p82, %p83
      %p86 = scmp.ne.s32.totalorder %s71, %s85
      %p87 = scmp.eq.s32.totalorder %s33, 0
      %p88 = por %p86, %p87
      %s89 = ssub.s32 %s34, %s46
      %p90 = scmp.eq.s32.totalorder %s89, 0
      %s92 = sadd.s32 %s91, 1
      %s93 = scalar_select %p90, %s91, %s92
      %p96 = pneg %p90
      %p97 = scmp.eq.s32.totalorder %s27, 7
      %p98 = por %p96, %p97
      %p99 = scmp.ne.s32.totalorder %s91, %s94
      %p100 = scmp.eq.s32.totalorder %s27, 0
      %p101 = por %p99, %p100
      %p102 = scmp.ne.s32.totalorder %s91, %s94
      %p103 = scmp.eq.s32.totalorder %s32, 7
      %p104 = por %p102, %p103
      %p105 = scmp.ne.s32.totalorder %s94, %s95
      %p106 = scmp.eq.s32.totalorder %s32, 0
      %p107 = por %p105, %p106
      %p108 = scmp.ne.s32.totalorder %s94, %s95
      %p109 = scmp.eq.s32.totalorder %s33, 7
      %p110 = por %p108, %p109
      %p112 = scmp.ne.s32.totalorder %s95, %s111
      %p113 = scmp.eq.s32.totalorder %s33, 0
      %p114 = por %p112, %p113
      %s115 = ssub.s32 %s34, %s46
      %p116 = scmp.eq.s32.totalorder %s115, 0
      %s118 = sadd.s32 %s117, 1
      %s119 = scalar_select %p116, %s117, %s118
      %p122 = pneg %p116
      %p123 = scmp.eq.s32.totalorder %s27, 7
      %p124 = por %p122, %p123
      %p125 = scmp.ne.s32.totalorder %s117, %s120
      %p126 = scmp.eq.s32.totalorder %s27, 0
      %p127 = por %p125, %p126
      %p128 = scmp.ne.s32.totalorder %s117, %s120
      %p129 = scmp.eq.s32.totalorder %s32, 7
      %p130 = por %p128, %p129
      %p131 = scmp.ne.s32.totalorder %s120, %s121
      %p132 = scmp.eq.s32.totalorder %s32, 0
      %p133 = por %p131, %p132
      %p134 = scmp.ne.s32.totalorder %s120, %s121
      %p135 = scmp.eq.s32.totalorder %s33, 7
      %p136 = por %p134, %p135
      %p138 = scmp.ne.s32.totalorder %s121, %s137
      %p139 = scmp.eq.s32.totalorder %s33, 0
      %p140 = por %p138, %p139
      %s141 = ssub.s32 %s34, %s46
      %p142 = scmp.eq.s32.totalorder %s141, 0
      %s144 = sadd.s32 %s143, 1
      %s145 = scalar_select %p142, %s143, %s144
      %p148 = pneg %p142
      %p149 = scmp.eq.s32.totalorder %s27, 7
      %p150 = por %p148, %p149
      %p151 = scmp.ne.s32.totalorder %s143, %s146
      %p152 = scmp.eq.s32.totalorder %s27, 0
      %p153 = por %p151, %p152
      %p154 = scmp.ne.s32.totalorder %s143, %s146
      %p155 = scmp.eq.s32.totalorder %s32, 7
      %p156 = por %p154, %p155
      %p157 = scmp.ne.s32.totalorder %s146, %s147
      %p158 = scmp.eq.s32.totalorder %s32, 0
      %p159 = por %p157, %p158
      %p160 = scmp.ne.s32.totalorder %s146, %s147
      %p161 = scmp.eq.s32.totalorder %s33, 7
      %p162 = por %p160, %p161
      %p164 = scmp.ne.s32.totalorder %s147, %s163
      %p165 = scmp.eq.s32.totalorder %s33, 0
      %p166 = por %p164, %p165
      %s167 = ssub.s32 %s34, %s46
      %p168 = scmp.eq.s32.totalorder %s167, 0
      %s170 = sadd.s32 %s169, 1
      %s171 = scalar_select %p168, %s169, %s170
      %p174 = pneg %p168
      %p175 = scmp.eq.s32.totalorder %s27, 7
      %p176 = por %p174, %p175
      %p177 = scmp.ne.s32.totalorder %s169, %s172
      %p178 = scmp.eq.s32.totalorder %s27, 0
      %p179 = por %p177, %p178
      %p180 = scmp.ne.s32.totalorder %s169, %s172
      %p181 = scmp.eq.s32.totalorder %s32, 7
      %p182 = por %p180, %p181
      %p183 = scmp.ne.s32.totalorder %s172, %s173
      %p184 = scmp.eq.s32.totalorder %s32, 0
      %p185 = por %p183, %p184
      %p186 = scmp.ne.s32.totalorder %s172, %s173
      %p187 = scmp.eq.s32.totalorder %s33, 7
      %p188 = por %p186, %p187
      %p190 = scmp.ne.s32.totalorder %s173, %s189
      %p191 = scmp.eq.s32.totalorder %s33, 0
      %p192 = por %p190, %p191
      %s193 = ssub.s32 %s34, %s46
      %p194 = scmp.eq.s32.totalorder %s193, 0
      %s196 = sadd.s32 %s195, 1
      %s197 = scalar_select %p194, %s195, %s196
      %p200 = pneg %p194
      %p201 = scmp.eq.s32.totalorder %s27, 7
      %p202 = por %p200, %p201
      %p203 = scmp.ne.s32.totalorder %s195, %s198
      %p204 = scmp.eq.s32.totalorder %s27, 0
      %p205 = por %p203, %p204
      %p206 = scmp.ne.s32.totalorder %s195, %s198
      %p207 = scmp.eq.s32.totalorder %s32, 7
      %p208 = por %p206, %p207
      %p209 = scmp.ne.s32.totalorder %s198, %s199
      %p210 = scmp.eq.s32.totalorder %s32, 0
      %p211 = por %p209, %p210
      %p212 = scmp.ne.s32.totalorder %s198, %s199
      %p213 = scmp.eq.s32.totalorder %s33, 7
      %p214 = por %p212, %p213
      %p216 = scmp.ne.s32.totalorder %s199, %s215
      %p217 = scmp.eq.s32.totalorder %s33, 0
      %p218 = por %p216, %p217
      %s219 = ssub.s32 %s34, %s46
      %p220 = scmp.eq.s32.totalorder %s219, 0
      %s222 = sadd.s32 %s221, 1
      %s223 = scalar_select %p220, %s221, %s222
      %p226 = pneg %p220
      %p227 = scmp.eq.s32.totalorder %s27, 7
      %p228 = por %p226, %p227
      %p229 = scmp.ne.s32.totalorder %s221, %s224
      %p230 = scmp.eq.s32.totalorder %s27, 0
      %p231 = por %p229, %p230
      %p232 = scmp.ne.s32.totalorder %s221, %s224
      %p233 = scmp.eq.s32.totalorder %s32, 7
      %p234 = por %p232, %p233
      %p235 = scmp.ne.s32.totalorder %s224, %s225
      %p236 = scmp.eq.s32.totalorder %s32, 0
      %p237 = por %p235, %p236
      %p238 = scmp.ne.s32.totalorder %s224, %s225
      %p239 = scmp.eq.s32.totalorder %s33, 7
      %p240 = por %p238, %p239
      %p242 = scmp.ne.s32.totalorder %s225, %s241
      %p243 = scmp.eq.s32.totalorder %s33, 0
      %p244 = por %p242, %p243
      %s245 = ssub.s32 %s34, %s46
      %s246 = ssub.s32 %s35, %s42
      %s247 = sor.u32 %s245, %s246
      %p248 = scmp.eq.s32.totalorder %s247, 0
      %s250 = sadd.s32 %s249, 1
      %s251 = scalar_select %p248, %s249, %s250
      %p254 = pneg %p248
      %p255 = scmp.eq.s32.totalorder %s27, 7
      %p256 = por %p254, %p255
      %p257 = scmp.ne.s32.totalorder %s249, %s252
      %p258 = scmp.eq.s32.totalorder %s27, 0
      %p259 = por %p257, %p258
      %p260 = scmp.ne.s32.totalorder %s249, %s252
      %p261 = scmp.eq.s32.totalorder %s32, 7
      %p262 = por %p260, %p261
      %p263 = scmp.ne.s32.totalorder %s252, %s253
      %p264 = scmp.eq.s32.totalorder %s32, 0
      %p265 = por %p263, %p264
      %p266 = scmp.ne.s32.totalorder %s252, %s253
      %p267 = scmp.eq.s32.totalorder %s33, 7
      %p268 = por %p266, %p267
      %p270 = scmp.ne.s32.totalorder %s253, %s269
      %p271 = scmp.eq.s32.totalorder %s33, 0
      %p272 = por %p270, %p271
      %s273 = ssub.s32 %s34, %s46
      %s274 = ssub.s32 %s35, %s42
      %s275 = sor.u32 %s273, %s274
      %p276 = scmp.eq.s32.totalorder %s275, 0
      %s278 = sadd.s32 %s277, 1
      %s279 = scalar_select %p276, %s277, %s278
      %p282 = pneg %p276
      %p283 = scmp.eq.s32.totalorder %s27, 7
      %p284 = por %p282, %p283
      %p285 = scmp.ne.s32.totalorder %s277, %s280
      %p286 = scmp.eq.s32.totalorder %s27, 0
      %p287 = por %p285, %p286
      %p288 = scmp.ne.s32.totalorder %s277, %s280
      %p289 = scmp.eq.s32.totalorder %s32, 7
      %p290 = por %p288, %p289
      %p291 = scmp.ne.s32.totalorder %s280, %s281
      %p292 = scmp.eq.s32.totalorder %s32, 0
      %p293 = por %p291, %p292
      %p294 = scmp.ne.s32.totalorder %s280, %s281
      %p295 = scmp.eq.s32.totalorder %s33, 7
      %p296 = por %p294, %p295
      %p298 = scmp.ne.s32.totalorder %s281, %s297
      %p299 = scmp.eq.s32.totalorder %s33, 0
      %p300 = por %p298, %p299
      %s301 = ssub.s32 %s34, %s46
      %s302 = ssub.s32 %s35, %s42
      %s303 = sor.u32 %s301, %s302
      %p304 = scmp.eq.s32.totalorder %s303, 0
      %s306 = sadd.s32 %s305, 1
      %s307 = scalar_select %p304, %s305, %s306
      %p310 = pneg %p304
      %p311 = scmp.eq.s32.totalorder %s27, 7
      %p312 = por %p310, %p311
      %p313 = scmp.ne.s32.totalorder %s305, %s308
      %p314 = scmp.eq.s32.totalorder %s27, 0
      %p315 = por %p313, %p314
      %p316 = scmp.ne.s32.totalorder %s305, %s308
      %p317 = scmp.eq.s32.totalorder %s32, 7
      %p318 = por %p316, %p317
      %p319 = scmp.ne.s32.totalorder %s308, %s309
      %p320 = scmp.eq.s32.totalorder %s32, 0
      %p321 = por %p319, %p320
      %p322 = scmp.ne.s32.totalorder %s308, %s309
      %p323 = scmp.eq.s32.totalorder %s33, 7
      %p324 = por %p322, %p323
      %p326 = scmp.ne.s32.totalorder %s309, %s325
      %p327 = scmp.eq.s32.totalorder %s33, 0
      %p328 = por %p326, %p327
      %s329 = ssub.s32 %s34, %s46
      %p330 = scmp.eq.s32.totalorder %s329, 0
      %s332 = sadd.s32 %s331, 1
      %s333 = scalar_select %p330, %s331, %s332
      %p336 = pneg %p330
      %p337 = scmp.eq.s32.totalorder %s27, 7
      %p338 = por %p336, %p337
      %p339 = scmp.ne.s32.totalorder %s331, %s334
      %p340 = scmp.eq.s32.totalorder %s27, 0
      %p341 = por %p339, %p340
      %p342 = scmp.ne.s32.totalorder %s331, %s334
      %p343 = scmp.eq.s32.totalorder %s32, 7
      %p344 = por %p342, %p343
      %p345 = scmp.ne.s32.totalorder %s334, %s335
      %p346 = scmp.eq.s32.totalorder %s32, 0
      %p347 = por %p345, %p346
      %p348 = scmp.ne.s32.totalorder %s334, %s335
      %p349 = scmp.eq.s32.totalorder %s33, 7
      %p350 = por %p348, %p349
      %p352 = scmp.ne.s32.totalorder %s335, %s351
      %p353 = scmp.eq.s32.totalorder %s33, 0
      %p354 = por %p352, %p353
      %s355 = ssub.s32 %s34, %s46
      %p356 = scmp.eq.s32.totalorder %s355, 0
      %s358 = sadd.s32 %s357, 1
      %s359 = scalar_select %p356, %s357, %s358
      %p362 = pneg %p356
      %p363 = scmp.eq.s32.totalorder %s27, 7
      %p364 = por %p362, %p363
      %p365 = scmp.ne.s32.totalorder %s357, %s360
      %p366 = scmp.eq.s32.totalorder %s27, 0
      %p367 = por %p365, %p366
      %p368 = scmp.ne.s32.totalorder %s357, %s360
      %p369 = scmp.eq.s32.totalorder %s32, 7
      %p370 = por %p368, %p369
      %p371 = scmp.ne.s32.totalorder %s360, %s361
      %p372 = scmp.eq.s32.totalorder %s32, 0
      %p373 = por %p371, %p372
      %p374 = scmp.ne.s32.totalorder %s360, %s361
      %p375 = scmp.eq.s32.totalorder %s33, 7
      %p376 = por %p374, %p375
      %p378 = scmp.ne.s32.totalorder %s361, %s377
      %p379 = scmp.eq.s32.totalorder %s33, 0
      %p380 = por %p378, %p379
      %s381 = ssub.s32 %s34, %s46
      %p382 = scmp.eq.s32.totalorder %s381, 0
      %s384 = sadd.s32 %s383, 1
      %s385 = scalar_select %p382, %s383, %s384
      %p388 = pneg %p382
      %p389 = scmp.eq.s32.totalorder %s27, 7
      %p390 = por %p388, %p389
      %p391 = scmp.ne.s32.totalorder %s383, %s386
      %p392 = scmp.eq.s32.totalorder %s27, 0
      %p393 = por %p391, %p392
      %p394 = scmp.ne.s32.totalorder %s383, %s386
      %p395 = scmp.eq.s32.totalorder %s32, 7
      %p396 = por %p394, %p395
      %p397 = scmp.ne.s32.totalorder %s386, %s387
      %p398 = scmp.eq.s32.totalorder %s32, 0
      %p399 = por %p397, %p398
      %p400 = scmp.ne.s32.totalorder %s386, %s387
      %p401 = scmp.eq.s32.totalorder %s33, 7
      %p402 = por %p400, %p401
      %p404 = scmp.ne.s32.totalorder %s387, %s403
      %p405 = scmp.eq.s32.totalorder %s33, 0
      %p406 = por %p404, %p405
      %s408 = sadd.s32 %s407, 1
      %p411 = scmp.eq.s32.totalorder %s27, 7
      %p412 = scmp.ne.s32.totalorder %s407, %s409
      %p413 = scmp.eq.s32.totalorder %s27, 0
      %p414 = por %p412, %p413
      %p415 = scmp.ne.s32.totalorder %s407, %s409
      %p416 = scmp.eq.s32.totalorder %s32, 7
      %p417 = por %p415, %p416
      %p418 = scmp.ne.s32.totalorder %s409, %s410
      %p419 = scmp.eq.s32.totalorder %s32, 0
      %p420 = por %p418, %p419
      %p421 = scmp.ne.s32.totalorder %s409, %s410
      %p422 = scmp.eq.s32.totalorder %s33, 7
      %p423 = por %p421, %p422
      %p425 = scmp.ne.s32.totalorder %s410, %s424
      %p426 = scmp.eq.s32.totalorder %s33, 0
      %p427 = por %p425, %p426
      %p428 = scmp.le.s32.totalorder 1, %s27
      %p429 = scmp.lt.s32.totalorder %s27, 9
      %p430 = pnand %p428, %p429
      %p431 = pneg %p430
      // Predicated region
      $region9: #{entity_represent_forward.1} parent=5 // pred_check
        _
      $region10: #{entity_represent_forward.1} parent=5 // pred_check_branch
        %433 = sbr.rel (%p430) target = $region12
      $region11: #{entity_represent_forward.1} parent=5 // pred_region
        %s434 = ssub.s32 %s27, 1
        // Predicated region
        $region13: #{entity_represent_forward.1} parent=11 // pred_check
          %p435 = pneg %p60
        $region14: #{entity_represent_forward.1} parent=11 // pred_check_branch
          %437 = sbr.rel (%p435) target = $region16
        $region15: #{entity_represent_forward.1} parent=11 // pred_region
          _
        $region16: #{entity_represent_forward.1} parent=11 // pred_fallthru
          _
        // Predicated region
        $region17: #{entity_represent_forward.1} parent=11 // pred_check
          %p438 = pneg %p81
        $region18: #{entity_represent_forward.1} parent=11 // pred_check_branch
          %440 = sbr.rel (%p438) target = $region20
        $region19: #{entity_represent_forward.1} parent=11 // pred_region
          _
        $region20: #{entity_represent_forward.1} parent=11 // pred_fallthru
          _
      $region12: #{entity_represent_forward.1} parent=5 // pred_fallthru
        _
      %p441 = scmp.lt.s32.totalorder %s27, 8
      // Predicated region
      $region21: #{entity_represent_forward.1} parent=5 // pred_check
        %p442 = pneg %p441
      $region22: #{entity_represent_forward.1} parent=5 // pred_check_branch
        %444 = sbr.rel (%p442) target = $region24
      $region23: #{entity_represent_forward.1} parent=5 // pred_region
        // Predicated region
        $region25: #{entity_represent_forward.1} parent=23 // pred_check
          %p445 = pneg %p101
        $region26: #{entity_represent_forward.1} parent=23 // pred_check_branch
          %447 = sbr.rel (%p445) target = $region28
        $region27: #{entity_represent_forward.1} parent=23 // pred_region
          %s448 = sand.u32 %s91, 1
          %s449 = scalar_lea.sflag [#allocation5], %s448
          %s450 = sand.u32 %s91, 1
          %s451 = smul.addr %s450, 192
          %s452 = scalar_lea.vmem [#allocation4], %s451
          %454 = vsyncadd %s449, 0
          %s455 = smul.addr %s34, 48
          %s456 = smul.addr %s455, 4
          %s457 = scalar_lea.hbm %s2, %s456
          %s458 = sshll.u32 %s457, 4
          %s459 = int_to_ptr.hbm [resolvable:$true] %s458
          %s460 = sshll.u32 %s452, 4
          %s461 = int_to_ptr.vmem [resolvable:$true] %s460
          %466 = dma.hbm_to_vmem [thread:$0]  %s459, 3072, %s461, %s449, 192, 192, 12
        $region28: #{entity_represent_forward.1} parent=23 // pred_fallthru
          _
        // Predicated region
        $region29: #{entity_represent_forward.1} parent=23 // pred_check
          %p467 = pneg %p127
        $region30: #{entity_represent_forward.1} parent=23 // pred_check_branch
          %469 = sbr.rel (%p467) target = $region32
        $region31: #{entity_represent_forward.1} parent=23 // pred_region
          %p470 = scmp.lt.s32.totalorder %s34, 1
          %s471 = scalar_select %p470, %s34, 1
          %s472 = smul.addr %s471, 3
          %s473 = scalar_lea.vmem %s3, %s472
        $region32: #{entity_represent_forward.1} parent=23 // pred_fallthru
          _
        // Predicated region
        $region33: #{entity_represent_forward.1} parent=23 // pred_check
          %p474 = pneg %p153
        $region34: #{entity_represent_forward.1} parent=23 // pred_check_branch
          %476 = sbr.rel (%p474) target = $region36
        $region35: #{entity_represent_forward.1} parent=23 // pred_region
          %p477 = scmp.lt.s32.totalorder %s34, 1
          %s478 = scalar_select %p477, %s34, 1
          %s479 = smul.addr %s478, 16
          %s480 = smul.addr %s479, 4
          %s481 = scalar_lea.vmem %s4, %s480
        $region36: #{entity_represent_forward.1} parent=23 // pred_fallthru
          _
        // Predicated region
        $region37: #{entity_represent_forward.1} parent=23 // pred_check
          %p482 = pneg %p179
        $region38: #{entity_represent_forward.1} parent=23 // pred_check_branch
          %484 = sbr.rel (%p482) target = $region40
        $region39: #{entity_represent_forward.1} parent=23 // pred_region
          %p485 = scmp.lt.s32.totalorder %s34, 1
          %s486 = scalar_select %p485, %s34, 1
          %s487 = scalar_lea.vmem %s5, %s486
        $region40: #{entity_represent_forward.1} parent=23 // pred_fallthru
          _
        // Predicated region
        $region41: #{entity_represent_forward.1} parent=23 // pred_check
          %p488 = pneg %p205
        $region42: #{entity_represent_forward.1} parent=23 // pred_check_branch
          %490 = sbr.rel (%p488) target = $region44
        $region43: #{entity_represent_forward.1} parent=23 // pred_region
          %p491 = scmp.lt.s32.totalorder %s34, 1
          %s492 = scalar_select %p491, %s34, 1
          %s493 = scalar_lea.vmem %s6, %s492
        $region44: #{entity_represent_forward.1} parent=23 // pred_fallthru
          _
        // Predicated region
        $region45: #{entity_represent_forward.1} parent=23 // pred_check
          %p494 = pneg %p231
        $region46: #{entity_represent_forward.1} parent=23 // pred_check_branch
          %496 = sbr.rel (%p494) target = $region48
        $region47: #{entity_represent_forward.1} parent=23 // pred_region
          %p497 = scmp.lt.s32.totalorder %s34, 1
          %s498 = scalar_select %p497, %s34, 1
          %s499 = scalar_lea.vmem %s7, %s498
        $region48: #{entity_represent_forward.1} parent=23 // pred_fallthru
          _
        // Predicated region
        $region49: #{entity_represent_forward.1} parent=23 // pred_check
          %p500 = pneg %p259
        $region50: #{entity_represent_forward.1} parent=23 // pred_check_branch
          %502 = sbr.rel (%p500) target = $region52
        $region51: #{entity_represent_forward.1} parent=23 // pred_region
          %s503 = sand.u32 %s27, 1
          %s504 = scalar_lea.sflag [#allocation8], %s503
          %s505 = sand.u32 %s249, 1
          %s506 = smul.addr %s505, 256
          %s507 = scalar_lea.vmem [#allocation7], %s506
          %s508 = smul.u32 4, %s35
          %510 = vsyncadd %s504, 0
          %s511 = smul.addr %s34, 256
          %s512 = sadd.s32 %s508, %s511
          %s513 = smul.addr %s512, 4
          %s514 = scalar_lea.hbm %s8, %s513
          %s515 = sshll.u32 %s514, 4
          %s516 = int_to_ptr.hbm [resolvable:$true] %s515
          %s517 = sshll.u32 %s507, 4
          %s518 = int_to_ptr.vmem [resolvable:$true] %s517
          %523 = dma.hbm_to_vmem [thread:$0]  %s516, 4096, %s518, %s504, 1024, 256, 16
        $region52: #{entity_represent_forward.1} parent=23 // pred_fallthru
          _
        // Predicated region
        $region53: #{entity_represent_forward.1} parent=23 // pred_check
          %p524 = pneg %p287
        $region54: #{entity_represent_forward.1} parent=23 // pred_check_branch
          %526 = sbr.rel (%p524) target = $region56
        $region55: #{entity_represent_forward.1} parent=23 // pred_region
          %s527 = smul.u32 4, %s35
          %p528 = scmp.lt.s32.totalorder %s34, 1
          %s529 = scalar_select %p528, %s34, 1
          %p530 = scmp.lt.s32.totalorder %s527, 15
          %s531 = scalar_select %p530, %s527, 15
          %s532 = smul.addr %s529, 16
          %s533 = sadd.s32 %s531, %s532
          %s534 = scalar_lea.vmem %s9, %s533
          %s535 = smul.u32 4, %s35
        $region56: #{entity_represent_forward.1} parent=23 // pred_fallthru
          _
        // Predicated region
        $region57: #{entity_represent_forward.1} parent=23 // pred_check
          %p536 = pneg %p315
        $region58: #{entity_represent_forward.1} parent=23 // pred_check_branch
          %538 = sbr.rel (%p536) target = $region60
        $region59: #{entity_represent_forward.1} parent=23 // pred_region
          %s539 = sand.u32 %s27, 1
          %s540 = scalar_lea.sflag [#allocation8], %s539
          %s541 = sand.u32 %s305, 1
          %s542 = smul.addr %s541, 256
          %s543 = scalar_lea.vmem [#allocation9], %s542
          %s544 = smul.u32 64, %s35
          %546 = vsyncadd %s540, 0
          %s547 = smul.addr %s34, 256
          %s548 = sadd.s32 %s544, %s547
          %s549 = smul.addr %s548, 4
          %s550 = scalar_lea.hbm %s10, %s549
          %s551 = sshll.u32 %s550, 4
          %s552 = int_to_ptr.hbm [resolvable:$true] %s551
          %s553 = sshll.u32 %s543, 4
          %s554 = int_to_ptr.vmem [resolvable:$true] %s553
          %559 = dma.hbm_to_vmem [thread:$0]  %s552, 4096, %s554, %s540, 64, 64, 4
        $region60: #{entity_represent_forward.1} parent=23 // pred_fallthru
          _
        // Predicated region
        $region61: #{entity_represent_forward.1} parent=23 // pred_check
          %p560 = pneg %p341
        $region62: #{entity_represent_forward.1} parent=23 // pred_check_branch
          %562 = sbr.rel (%p560) target = $region64
        $region63: #{entity_represent_forward.1} parent=23 // pred_region
          %p563 = scmp.lt.s32.totalorder %s34, 1
          %s564 = scalar_select %p563, %s34, 1
          %s565 = scalar_lea.vmem %s11, %s564
        $region64: #{entity_represent_forward.1} parent=23 // pred_fallthru
          _
        // Predicated region
        $region65: #{entity_represent_forward.1} parent=23 // pred_check
          %p566 = pneg %p367
        $region66: #{entity_represent_forward.1} parent=23 // pred_check_branch
          %568 = sbr.rel (%p566) target = $region68
        $region67: #{entity_represent_forward.1} parent=23 // pred_region
          %p569 = scmp.lt.s32.totalorder %s34, 1
          %s570 = scalar_select %p569, %s34, 1
          %s571 = scalar_lea.vmem %s12, %s570
        $region68: #{entity_represent_forward.1} parent=23 // pred_fallthru
          _
        // Predicated region
        $region69: #{entity_represent_forward.1} parent=23 // pred_check
          %p572 = pneg %p393
        $region70: #{entity_represent_forward.1} parent=23 // pred_check_branch
          %574 = sbr.rel (%p572) target = $region72
        $region71: #{entity_represent_forward.1} parent=23 // pred_region
          %p575 = scmp.lt.s32.totalorder %s34, 1
          %s576 = scalar_select %p575, %s34, 1
          %s577 = scalar_lea.vmem %s13, %s576
        $region72: #{entity_represent_forward.1} parent=23 // pred_fallthru
          _
      $region24: #{entity_represent_forward.1} parent=5 // pred_fallthru
        _
      %p578 = scmp.le.s32.totalorder 1, %s27
      %p579 = scmp.lt.s32.totalorder %s27, 9
      %p580 = pnand %p578, %p579
      %p581 = pneg %p580
      // Predicated region
      $region73: #{entity_represent_forward.1} parent=5 // pred_check
        _
      $region74: #{entity_represent_forward.1} parent=5 // pred_check_branch
        %583 = sbr.rel (%p580) target = $region76
      $region75: #{entity_represent_forward.1} parent=5 // pred_region
        %s584 = ssub.s32 %s27, 1
        %s585 = sand.u32 %s94, 1
        %s586 = scalar_lea.sflag [#allocation5], %s585
        %s587 = sand.u32 %s94, 1
        %s588 = smul.addr %s587, 192
        %s589 = scalar_lea.vmem [#allocation4], %s588
        // Predicated region
        $region77: #{entity_represent_forward.1} parent=75 // pred_check
          %p590 = pneg %p107
        $region78: #{entity_represent_forward.1} parent=75 // pred_check_branch
          %592 = sbr.rel (%p590) target = $region80
        $region79: #{entity_represent_forward.1} parent=75 // pred_region
          %594 = dma.done %s586, 3072
        $region80: #{entity_represent_forward.1} parent=75 // pred_fallthru
          _
        %s595 = sand.u32 %s32, 1
        %s596 = scalar_lea.sflag [#allocation8], %s595
        %s597 = sand.u32 %s252, 1
        %s598 = smul.addr %s597, 256
        %s599 = scalar_lea.vmem [#allocation7], %s598
        // Predicated region
        $region81: #{entity_represent_forward.1} parent=75 // pred_check
          %p600 = pneg %p265
        $region82: #{entity_represent_forward.1} parent=75 // pred_check_branch
          %602 = sbr.rel (%p600) target = $region84
        $region83: #{entity_represent_forward.1} parent=75 // pred_region
          %604 = dma.done %s596, 4096
        $region84: #{entity_represent_forward.1} parent=75 // pred_fallthru
          _
        %s605 = sand.u32 %s32, 1
        %s606 = scalar_lea.sflag [#allocation8], %s605
        %s607 = sand.u32 %s308, 1
        %s608 = smul.addr %s607, 256
        %s609 = scalar_lea.vmem [#allocation9], %s608
        // Predicated region
        $region85: #{entity_represent_forward.1} parent=75 // pred_check
          %p610 = pneg %p321
        $region86: #{entity_represent_forward.1} parent=75 // pred_check_branch
          %612 = sbr.rel (%p610) target = $region88
        $region87: #{entity_represent_forward.1} parent=75 // pred_region
          %614 = dma.done %s606, 4096
        $region88: #{entity_represent_forward.1} parent=75 // pred_fallthru
          _
        %p615 = pneg %p60
        %p616 = pneg %p57
        %p617 = pneg %p81
        %p618 = pneg %p78
        %s619 = sand.u32 %s94, 1
        %s620 = scalar_lea.sflag [#allocation5], %s619
        %s621 = sand.u32 %s94, 1
        %s622 = smul.addr %s621, 192
        %s623 = scalar_lea.vmem [#allocation4], %s622
        %p624 = pneg %p107
        %p625 = pneg %p104
        %p626 = scmp.lt.s32.totalorder %s36, 1
        %s627 = scalar_select %p626, %s36, 1
        %s628 = smul.addr %s627, 3
        %s629 = scalar_lea.vmem %s3, %s628
        %p630 = pneg %p133
        %p631 = pneg %p130
        %p632 = scmp.lt.s32.totalorder %s36, 1
        %s633 = scalar_select %p632, %s36, 1
        %s634 = smul.addr %s633, 16
        %s635 = smul.addr %s634, 4
        %s636 = scalar_lea.vmem %s4, %s635
        %p637 = pneg %p159
        %p638 = pneg %p156
        %p639 = scmp.lt.s32.totalorder %s36, 1
        %s640 = scalar_select %p639, %s36, 1
        %s641 = scalar_lea.vmem %s5, %s640
        %p642 = pneg %p185
        %p643 = pneg %p182
        %p644 = scmp.lt.s32.totalorder %s36, 1
        %s645 = scalar_select %p644, %s36, 1
        %s646 = scalar_lea.vmem %s6, %s645
        %p647 = pneg %p211
        %p648 = pneg %p208
        %p649 = scmp.lt.s32.totalorder %s36, 1
        %s650 = scalar_select %p649, %s36, 1
        %s651 = scalar_lea.vmem %s7, %s650
        %p652 = pneg %p237
        %p653 = pneg %p234
        %s654 = sand.u32 %s32, 1
        %s655 = scalar_lea.sflag [#allocation8], %s654
        %s656 = sand.u32 %s252, 1
        %s657 = smul.addr %s656, 256
        %s658 = scalar_lea.vmem [#allocation7], %s657
        %p659 = pneg %p265
        %p660 = pneg %p262
        %s661 = smul.u32 4, %s37
        %p662 = scmp.lt.s32.totalorder %s36, 1
        %s663 = scalar_select %p662, %s36, 1
        %p664 = scmp.lt.s32.totalorder %s661, 15
        %s665 = scalar_select %p664, %s661, 15
        %s666 = smul.addr %s663, 16
        %s667 = sadd.s32 %s665, %s666
        %s668 = scalar_lea.vmem %s9, %s667
        %p669 = pneg %p293
        %p670 = pneg %p290
        %s671 = sand.u32 %s32, 1
        %s672 = scalar_lea.sflag [#allocation8], %s671
        %s673 = sand.u32 %s308, 1
        %s674 = smul.addr %s673, 256
        %s675 = scalar_lea.vmem [#allocation9], %s674
        %p676 = pneg %p321
        %p677 = pneg %p318
        %p678 = scmp.lt.s32.totalorder %s36, 1
        %s679 = scalar_select %p678, %s36, 1
        %s680 = scalar_lea.vmem %s11, %s679
        %p681 = pneg %p347
        %p682 = pneg %p344
        %p683 = scmp.lt.s32.totalorder %s36, 1
        %s684 = scalar_select %p683, %s36, 1
        %s685 = scalar_lea.vmem %s12, %s684
        %p686 = pneg %p373
        %p687 = pneg %p370
        %p688 = scmp.lt.s32.totalorder %s36, 1
        %s689 = scalar_select %p688, %s36, 1
        %s690 = scalar_lea.vmem %s13, %s689
        %p691 = pneg %p399
        %p692 = pneg %p396
        %p693 = pneg %p420
        %p694 = pneg %p417
        %p695 = scmp.lt.s32.totalorder %s36, 1
        %s696 = scalar_select %p695, %s36, 1
        %s697 = smul.addr %s696, 3
        %s698 = scalar_lea.vmem %s3, %s697
        %p699 = scmp.lt.s32.totalorder %s36, 1
        %s700 = scalar_select %p699, %s36, 1
        %s701 = smul.addr %s700, 16
        %s702 = smul.addr %s701, 4
        %s703 = scalar_lea.vmem %s4, %s702
        %p704 = scmp.lt.s32.totalorder %s36, 1
        %s705 = scalar_select %p704, %s36, 1
        %s706 = scalar_lea.vmem %s5, %s705
        %p707 = scmp.lt.s32.totalorder %s36, 1
        %s708 = scalar_select %p707, %s36, 1
        %s709 = scalar_lea.vmem %s6, %s708
        %p710 = scmp.lt.s32.totalorder %s36, 1
        %s711 = scalar_select %p710, %s36, 1
        %s712 = scalar_lea.vmem %s7, %s711
        %s713 = smul.u32 4, %s37
        %s714 = smul.u32 4, %s37
        %p715 = scmp.lt.s32.totalorder %s36, 1
        %s716 = scalar_select %p715, %s36, 1
        %p717 = scmp.lt.s32.totalorder %s714, 15
        %s718 = scalar_select %p717, %s714, 15
        %s719 = smul.addr %s716, 16
        %s720 = sadd.s32 %s718, %s719
        %s721 = scalar_lea.vmem %s9, %s720
        %s722 = smul.u32 4, %s37
        %s723 = smul.u32 64, %s37
        %p724 = scmp.lt.s32.totalorder %s36, 1
        %s725 = scalar_select %p724, %s36, 1
        %s726 = scalar_lea.vmem %s11, %s725
        %p727 = scmp.lt.s32.totalorder %s36, 1
        %s728 = scalar_select %p727, %s36, 1
        %s729 = scalar_lea.vmem %s12, %s728
        %p730 = scmp.lt.s32.totalorder %s36, 1
        %s731 = scalar_select %p730, %s36, 1
        %s732 = scalar_lea.vmem %s13, %s731
        %p734 = scmp.eq.s32.totalorder %s36, 0
        %p735 = scmp.eq.s32.totalorder %s37, 0
        %p736 = pnand %p734, %p735
        %p737 = pneg %p736
        // Predicated region
        $region89: #{entity_represent_forward.1} parent=75 // pred_check
          _
        $region90: #{entity_represent_forward.1} parent=75 // pred_check_branch
          %739 = sbr.rel (%p736) target = $region92
        $region91: #{entity_represent_forward.1} parent=75 // pred_region
          %v740 = vld [vmem:[%s0] sm:$0xff]
          %v741 = vld [vmem:[%s0 + $0x8] sm:$0xff]
          %742 = vst [vmem:[#allocation2] sm:$0xff] %v740
          %743 = vst [vmem:[#allocation2 + $0x8] sm:$0xff] %v741
        $region92: #{entity_represent_forward.1} parent=75 // pred_fallthru
          _
        // Predicated region
        $region93: #{entity_represent_forward.1} parent=75 // pred_check
          %p744 = pneg %p735
        $region94: #{entity_represent_forward.1} parent=75 // pred_check_branch
          %746 = sbr.rel (%p744) target = $region96
        $region95: #{entity_represent_forward.1} parent=75 // pred_region
          %v747 = vld [vmem:[#allocation2] sm:$0xff]
          %v748 = vld [vmem:[#allocation2 + $0x8] sm:$0xff]
          %v749 = vpack.c.bf16 %v748, %v747
          %v750 = vld [vmem:[%s589] sm:$0xff]
          %v751 = vld [vmem:[%s589 + $0x8] sm:$0xf]
          %v752 = vld [vmem:[%s589 + $0xc] sm:$0xff]
          %v753 = vld [vmem:[%s589 + $0x14] sm:$0xf]
          %v754 = vld [vmem:[%s589 + $0x18] sm:$0xff]
          %v755 = vld [vmem:[%s589 + $0x20] sm:$0xf]
          %v756 = vld [vmem:[%s589 + $0x24] sm:$0xff]
          %v757 = vld [vmem:[%s589 + $0x2c] sm:$0xf]
          %v758 = vld [vmem:[%s589 + $0x30] sm:$0xff]
          %v759 = vld [vmem:[%s589 + $0x38] sm:$0xf]
          %v760 = vld [vmem:[%s589 + $0x3c] sm:$0xff]
          %v761 = vld [vmem:[%s589 + $0x44] sm:$0xf]
          %v762 = vld [vmem:[%s589 + $0x48] sm:$0xff]
          %v763 = vld [vmem:[%s589 + $0x50] sm:$0xf]
          %v764 = vld [vmem:[%s589 + $0x54] sm:$0xff]
          %v765 = vld [vmem:[%s589 + $0x5c] sm:$0xf]
          %v766 = vld [vmem:[%s589 + $0x60] sm:$0xff]
          %v767 = vld [vmem:[%s589 + $0x68] sm:$0xf]
          %v768 = vld [vmem:[%s589 + $0x6c] sm:$0xff]
          %v769 = vld [vmem:[%s589 + $0x74] sm:$0xf]
          %v770 = vld [vmem:[%s589 + $0x78] sm:$0xff]
          %v771 = vld [vmem:[%s589 + $0x80] sm:$0xf]
          %v772 = vld [vmem:[%s589 + $0x84] sm:$0xff]
          %v773 = vld [vmem:[%s589 + $0x8c] sm:$0xf]
          %v774 = vld [vmem:[%s589 + $0x90] sm:$0xff]
          %v775 = vld [vmem:[%s589 + $0x98] sm:$0xf]
          %v776 = vld [vmem:[%s589 + $0x9c] sm:$0xff]
          %v777 = vld [vmem:[%s589 + $0xa4] sm:$0xf]
          %v778 = vld [vmem:[%s589 + $0xa8] sm:$0xff]
          %v779 = vld [vmem:[%s589 + $0xb0] sm:$0xf]
          %v780 = vld [vmem:[%s589 + $0xb4] sm:$0xff]
          %v781 = vld [vmem:[%s589 + $0xbc] sm:$0xf]
          %v782 = vld [vmem:[%s698] sm:$0x7]
          %v784 = vperm.slane %v782, 0
          %v785 = vperm.slane %v782, 1
          %v786 = vperm.slane %v782, 2
          %v822 = vunpack.c.l.b16 %v750
          %v823 = vunpack.c.h.b16 %v750
          %v824 = vunpack.c.l.b16 %v751
          %v825 = vunpack.c.l.b16 %v752
          %v826 = vunpack.c.h.b16 %v752
          %v827 = vunpack.c.l.b16 %v753
          %v828 = vunpack.c.l.b16 %v754
          %v829 = vunpack.c.h.b16 %v754
          %v830 = vunpack.c.l.b16 %v755
          %v831 = vunpack.c.l.b16 %v756
          %v832 = vunpack.c.h.b16 %v756
          %v833 = vunpack.c.l.b16 %v757
          %v834 = vunpack.c.l.b16 %v758
          %v835 = vunpack.c.h.b16 %v758
          %v836 = vunpack.c.l.b16 %v759
          %v837 = vunpack.c.l.b16 %v760
          %v838 = vunpack.c.h.b16 %v760
          %v839 = vunpack.c.l.b16 %v761
          %v840 = vunpack.c.l.b16 %v762
          %v841 = vunpack.c.h.b16 %v762
          %v842 = vunpack.c.l.b16 %v763
          %v843 = vunpack.c.l.b16 %v764
          %v844 = vunpack.c.h.b16 %v764
          %v845 = vunpack.c.l.b16 %v765
          %v846 = vunpack.c.l.b16 %v766
          %v847 = vunpack.c.h.b16 %v766
          %v848 = vunpack.c.l.b16 %v767
          %v849 = vunpack.c.l.b16 %v768
          %v850 = vunpack.c.h.b16 %v768
          %v851 = vunpack.c.l.b16 %v769
          %v852 = vunpack.c.l.b16 %v770
          %v853 = vunpack.c.h.b16 %v770
          %v854 = vunpack.c.l.b16 %v771
          %v855 = vunpack.c.l.b16 %v772
          %v856 = vunpack.c.h.b16 %v772
          %v857 = vunpack.c.l.b16 %v773
          %v858 = vunpack.c.l.b16 %v774
          %v859 = vunpack.c.h.b16 %v774
          %v860 = vunpack.c.l.b16 %v775
          %v861 = vunpack.c.l.b16 %v776
          %v862 = vunpack.c.h.b16 %v776
          %v863 = vunpack.c.l.b16 %v777
          %v864 = vunpack.c.l.b16 %v778
          %v865 = vunpack.c.h.b16 %v778
          %v866 = vunpack.c.l.b16 %v779
          %v867 = vunpack.c.l.b16 %v780
          %v868 = vunpack.c.h.b16 %v780
          %v869 = vunpack.c.l.b16 %v781
          %v870 = vpack.c.b16 %v825, %v822
          %v871 = vpack.c.b16 %v826, %v823
          %v872 = vpack.c.b16 %v827, %v824
          %v873 = vpack.c.b16 %v831, %v828
          %v874 = vpack.c.b16 %v832, %v829
          %v875 = vpack.c.b16 %v833, %v830
          %v876 = vpack.c.b16 %v837, %v834
          %v877 = vpack.c.b16 %v838, %v835
          %v878 = vpack.c.b16 %v839, %v836
          %v879 = vpack.c.b16 %v843, %v840
          %v880 = vpack.c.b16 %v844, %v841
          %v881 = vpack.c.b16 %v845, %v842
          %v882 = vpack.c.b16 %v849, %v846
          %v883 = vpack.c.b16 %v850, %v847
          %v884 = vpack.c.b16 %v851, %v848
          %v885 = vpack.c.b16 %v855, %v852
          %v886 = vpack.c.b16 %v856, %v853
          %v887 = vpack.c.b16 %v857, %v854
          %v888 = vpack.c.b16 %v861, %v858
          %v889 = vpack.c.b16 %v862, %v859
          %v890 = vpack.c.b16 %v863, %v860
          %v891 = vpack.c.b16 %v867, %v864
          %v892 = vpack.c.b16 %v868, %v865
          %v893 = vpack.c.b16 %v869, %v866
          %918 = vmatpush.bf16.msra.mxu0 %v891
          %919 = vmatpush.bf16.msra.mxu0 %v888
          %920 = vmatpush.bf16.msra.mxu0 %v885
          %921 = vmatpush.bf16.msra.mxu0 %v882
          %922 = vmatpush.bf16.msra.mxu0 %v879
          %923 = vmatpush.bf16.msra.mxu0 %v876
          %924 = vmatpush.bf16.msra.mxu0 %v873
          %925 = vmatpush.bf16.msra.mxu0 %v870
          %926 = vmatmul.bf16.gmra.mxu0 %v749
          %v927 = vpop.f32.mrf.mxu0
          %v928 = vadd.f32 %v784, %v927
          %v929 = vpop.f32.mrf.mxu0
          %v930 = vadd.f32 %v784, %v929
          %931 = vdwg.mxu0
          %932 = vmatpush.bf16.msra.mxu0 %v892
          %933 = vmatpush.bf16.msra.mxu0 %v889
          %934 = vmatpush.bf16.msra.mxu0 %v886
          %935 = vmatpush.bf16.msra.mxu0 %v883
          %936 = vmatpush.bf16.msra.mxu0 %v880
          %937 = vmatpush.bf16.msra.mxu0 %v877
          %938 = vmatpush.bf16.msra.mxu0 %v874
          %939 = vmatpush.bf16.msra.mxu0 %v871
          %940 = vmatmul.bf16.gmra.mxu0 %v749
          %v941 = vpop.f32.mrf.mxu0
          %v942 = vadd.f32 %v785, %v941
          %v943 = vpop.f32.mrf.mxu0
          %v944 = vadd.f32 %v785, %v943
          %945 = vdwg.mxu0
          %946 = vmatpush.bf16.msra.mxu0 %v893
          %947 = vmatpush.bf16.msra.mxu0 %v890
          %948 = vmatpush.bf16.msra.mxu0 %v887
          %949 = vmatpush.bf16.msra.mxu0 %v884
          %950 = vmatpush.bf16.msra.mxu0 %v881
          %951 = vmatpush.bf16.msra.mxu0 %v878
          %952 = vmatpush.bf16.msra.mxu0 %v875
          %953 = vmatpush.bf16.msra.mxu0 %v872
          %954 = vmatmul.bf16.gmra.mxu0 %v749
          %v955 = vpop.f32.mrf.mxu0
          %v956 = vadd.f32 %v786, %v955
          %v957 = vpop.f32.mrf.mxu0
          %v958 = vadd.f32 %v786, %v957
          %959 = vdwg.mxu0
          %v960 = vld [vmem:[%s1] sm:$0xff]
          %v962 = vrot.slane %v960, 1
          %v963 = vrot.slane %v960, 2
          %v964 = vrot.slane %v960, 3
          %v965 = vrot.slane %v960, 4
          %v966 = vrot.slane %v960, 5
          %v967 = vrot.slane %v960, 6
          %v968 = vrot.slane %v960, 7
          %v969 = vperm.slane %v960, 0
          %v970 = vperm.slane %v962, 0
          %v971 = vperm.slane %v963, 0
          %v972 = vperm.slane %v964, 0
          %v973 = vperm.slane %v965, 0
          %v974 = vperm.slane %v966, 0
          %v975 = vperm.slane %v967, 0
          %v976 = vperm.slane %v968, 0
          %v985 = vmul.f32 %v942, %v969
          %v986 = vmul.f32 %v942, %v970
          %v987 = vmul.f32 %v942, %v971
          %v988 = vmul.f32 %v942, %v972
          %v989 = vmul.f32 %v942, %v973
          %v990 = vmul.f32 %v942, %v974
          %v991 = vmul.f32 %v942, %v975
          %v992 = vmul.f32 %v942, %v976
          %v993 = vmul.f32 %v944, %v969
          %v994 = vmul.f32 %v944, %v970
          %v995 = vmul.f32 %v944, %v971
          %v996 = vmul.f32 %v944, %v972
          %v997 = vmul.f32 %v944, %v973
          %v998 = vmul.f32 %v944, %v974
          %v999 = vmul.f32 %v944, %v975
          %v1000 = vmul.f32 %v944, %v976
          %v1001 = vpack.c.bf16 %v985, %v985
          %v1002 = vpack.c.bf16 %v986, %v986
          %v1003 = vpack.c.bf16 %v987, %v987
          %v1004 = vpack.c.bf16 %v988, %v988
          %v1005 = vpack.c.bf16 %v989, %v989
          %v1006 = vpack.c.bf16 %v990, %v990
          %v1007 = vpack.c.bf16 %v991, %v991
          %v1008 = vpack.c.bf16 %v992, %v992
          %v1009 = vpack.c.bf16 %v993, %v993
          %v1010 = vpack.c.bf16 %v994, %v994
          %v1011 = vpack.c.bf16 %v995, %v995
          %v1012 = vpack.c.bf16 %v996, %v996
          %v1013 = vpack.c.bf16 %v997, %v997
          %v1014 = vpack.c.bf16 %v998, %v998
          %v1015 = vpack.c.bf16 %v999, %v999
          %v1016 = vpack.c.bf16 %v1000, %v1000
          %v1017 = vmul.f32 %v956, %v969
          %v1018 = vmul.f32 %v956, %v970
          %v1019 = vmul.f32 %v956, %v971
          %v1020 = vmul.f32 %v956, %v972
          %v1021 = vmul.f32 %v956, %v973
          %v1022 = vmul.f32 %v956, %v974
          %v1023 = vmul.f32 %v956, %v975
          %v1024 = vmul.f32 %v956, %v976
          %v1025 = vmul.f32 %v958, %v969
          %v1026 = vmul.f32 %v958, %v970
          %v1027 = vmul.f32 %v958, %v971
          %v1028 = vmul.f32 %v958, %v972
          %v1029 = vmul.f32 %v958, %v973
          %v1030 = vmul.f32 %v958, %v974
          %v1031 = vmul.f32 %v958, %v975
          %v1032 = vmul.f32 %v958, %v976
          %v1033 = vpack.c.bf16 %v1017, %v1017
          %v1034 = vpack.c.bf16 %v1018, %v1018
          %v1035 = vpack.c.bf16 %v1019, %v1019
          %v1036 = vpack.c.bf16 %v1020, %v1020
          %v1037 = vpack.c.bf16 %v1021, %v1021
          %v1038 = vpack.c.bf16 %v1022, %v1022
          %v1039 = vpack.c.bf16 %v1023, %v1023
          %v1040 = vpack.c.bf16 %v1024, %v1024
          %v1041 = vpack.c.bf16 %v1025, %v1025
          %v1042 = vpack.c.bf16 %v1026, %v1026
          %v1043 = vpack.c.bf16 %v1027, %v1027
          %v1044 = vpack.c.bf16 %v1028, %v1028
          %v1045 = vpack.c.bf16 %v1029, %v1029
          %v1046 = vpack.c.bf16 %v1030, %v1030
          %v1047 = vpack.c.bf16 %v1031, %v1031
          %v1048 = vpack.c.bf16 %v1032, %v1032
          %v1049 = vpack.c.bf16 %v928, %v928
          %v1050 = vpack.c.bf16 %v930, %v930
          %v1059 = vunpack.c.l.b16 %v1001
          %v1060 = vunpack.c.l.b16 %v1002
          %v1061 = vunpack.c.l.b16 %v1003
          %v1062 = vunpack.c.l.b16 %v1004
          %v1063 = vunpack.c.l.b16 %v1005
          %v1064 = vunpack.c.l.b16 %v1006
          %v1065 = vunpack.c.l.b16 %v1007
          %v1066 = vunpack.c.l.b16 %v1008
          %v1067 = vpack.c.b16 %v1060, %v1059
          %v1068 = vpack.c.b16 %v1062, %v1061
          %v1069 = vpack.c.b16 %v1064, %v1063
          %v1070 = vpack.c.b16 %v1066, %v1065
          %1075 = vmatpush.bf16.xpose.msra.mxu0 0
          %1076 = vmatpush.bf16.xpose.msra.mxu0 0
          %1077 = vmatpush.bf16.xpose.msra.mxu0 0
          %1078 = vmatpush.bf16.xpose.msra.mxu0 0
          %1079 = vmatpush.bf16.xpose.msra.mxu0 %v1070
          %1080 = vmatpush.bf16.xpose.msra.mxu0 %v1069
          %1081 = vmatpush.bf16.xpose.msra.mxu0 %v1068
          %1082 = vmatpush.bf16.xpose.msra.mxu0 %v1067
          %1083 = vmatmul.bf16.gmra.mxu0 %v1049
          %v1084 = vpop.f32.mrf.mxu0
          %v1085 = vadd.f32 0.0, %v1084
          %v1086 = vpop.f32.mrf.mxu0
          %1087 = vdwg.mxu0
          %v1096 = vunpack.c.l.b16 %v1009
          %v1097 = vunpack.c.l.b16 %v1010
          %v1098 = vunpack.c.l.b16 %v1011
          %v1099 = vunpack.c.l.b16 %v1012
          %v1100 = vunpack.c.l.b16 %v1013
          %v1101 = vunpack.c.l.b16 %v1014
          %v1102 = vunpack.c.l.b16 %v1015
          %v1103 = vunpack.c.l.b16 %v1016
          %v1104 = vpack.c.b16 %v1097, %v1096
          %v1105 = vpack.c.b16 %v1099, %v1098
          %v1106 = vpack.c.b16 %v1101, %v1100
          %v1107 = vpack.c.b16 %v1103, %v1102
          %1112 = vmatpush.bf16.xpose.msra.mxu0 0
          %1113 = vmatpush.bf16.xpose.msra.mxu0 0
          %1114 = vmatpush.bf16.xpose.msra.mxu0 0
          %1115 = vmatpush.bf16.xpose.msra.mxu0 0
          %1116 = vmatpush.bf16.xpose.msra.mxu0 %v1107
          %1117 = vmatpush.bf16.xpose.msra.mxu0 %v1106
          %1118 = vmatpush.bf16.xpose.msra.mxu0 %v1105
          %1119 = vmatpush.bf16.xpose.msra.mxu0 %v1104
          %1120 = vmatmul.bf16.gmra.mxu0 %v1050
          %v1121 = vpop.f32.mrf.mxu0
          %v1122 = vadd.f32 0.0, %v1121
          %v1123 = vpop.f32.mrf.mxu0
          %1124 = vdwg.mxu0
          %v1125 = vmul.f32 %v1085, 0.25
          %v1126 = vmul.f32 %v1122, 0.25
          %1129 = vrot.lane.b32.xlu0 %v1125, 120
          %v1130 = vpop.permute.xlu0 %1129
          %1131 = vrot.lane.b32.xlu0 %v1126, 120
          %v1132 = vpop.permute.xlu0 %1131
          %1135 = vrot.lane.b32.xlu0 %v1125, 112
          %v1136 = vpop.permute.xlu0 %1135
          %1137 = vrot.lane.b32.xlu0 %v1126, 112
          %v1138 = vpop.permute.xlu0 %1137
          %1141 = vrot.lane.b32.xlu0 %v1125, 104
          %v1142 = vpop.permute.xlu0 %1141
          %1143 = vrot.lane.b32.xlu0 %v1126, 104
          %v1144 = vpop.permute.xlu0 %1143
          %1147 = vrot.lane.b32.xlu0 %v1125, 96
          %v1148 = vpop.permute.xlu0 %1147
          %1149 = vrot.lane.b32.xlu0 %v1126, 96
          %v1150 = vpop.permute.xlu0 %1149
          %1153 = vrot.lane.b32.xlu0 %v1125, 88
          %v1154 = vpop.permute.xlu0 %1153
          %1155 = vrot.lane.b32.xlu0 %v1126, 88
          %v1156 = vpop.permute.xlu0 %1155
          %1159 = vrot.lane.b32.xlu0 %v1125, 80
          %v1160 = vpop.permute.xlu0 %1159
          %1161 = vrot.lane.b32.xlu0 %v1126, 80
          %v1162 = vpop.permute.xlu0 %1161
          %1165 = vrot.lane.b32.xlu0 %v1125, 72
          %v1166 = vpop.permute.xlu0 %1165
          %1167 = vrot.lane.b32.xlu0 %v1126, 72
          %v1168 = vpop.permute.xlu0 %1167
          %v1171 = vrot.slane %v1136, 4
          %vm1172 = vcmask 1047556
          %v1173 = vsel %vm1172, %v1171, %v1125
          %v1174 = vrot.slane %v1125, 4
          %v1175 = vsel %vm1172, %v1136, %v1174
          %v1177 = vunpack.c.l.s4 1983009808
          %v1178 = vunpack.c.0.s8 %v1177
          %v1179 = vperm.slane %v1173, %v1178
          %v1181 = vunpack.c.l.s4 1983009808
          %v1182 = vunpack.c.0.s8 %v1181
          %v1183 = vperm.slane %v1175, %v1182
          %v1184 = vrot.slane %v1142, 4
          %v1185 = vsel %vm1172, %v1184, %v1130
          %v1186 = vrot.slane %v1130, 4
          %v1187 = vsel %vm1172, %v1142, %v1186
          %v1189 = vunpack.c.l.s4 1983009808
          %v1190 = vunpack.c.0.s8 %v1189
          %v1191 = vperm.slane %v1185, %v1190
          %v1193 = vunpack.c.l.s4 1983009808
          %v1194 = vunpack.c.0.s8 %v1193
          %v1195 = vperm.slane %v1187, %v1194
          %v1196 = vrot.slane %v1160, 4
          %v1197 = vsel %vm1172, %v1196, %v1148
          %v1198 = vrot.slane %v1148, 4
          %v1199 = vsel %vm1172, %v1160, %v1198
          %v1201 = vunpack.c.l.s4 1983009808
          %v1202 = vunpack.c.0.s8 %v1201
          %v1203 = vperm.slane %v1197, %v1202
          %v1205 = vunpack.c.l.s4 1983009808
          %v1206 = vunpack.c.0.s8 %v1205
          %v1207 = vperm.slane %v1199, %v1206
          %v1208 = vrot.slane %v1166, 4
          %v1209 = vsel %vm1172, %v1208, %v1154
          %v1210 = vrot.slane %v1154, 4
          %v1211 = vsel %vm1172, %v1166, %v1210
          %v1213 = vunpack.c.l.s4 1983009808
          %v1214 = vunpack.c.0.s8 %v1213
          %v1215 = vperm.slane %v1209, %v1214
          %v1217 = vunpack.c.l.s4 1983009808
          %v1218 = vunpack.c.0.s8 %v1217
          %v1219 = vperm.slane %v1211, %v1218
          %v1220 = vrot.slane %v1191, 4
          %v1221 = vsel %vm1172, %v1220, %v1179
          %v1222 = vrot.slane %v1179, 4
          %v1223 = vsel %vm1172, %v1191, %v1222
          %v1225 = vunpack.c.l.s4 1934713408
          %v1226 = vunpack.c.0.s8 %v1225
          %v1227 = vperm.slane %v1221, %v1226
          %v1229 = vunpack.c.l.s4 1934713408
          %v1230 = vunpack.c.0.s8 %v1229
          %v1231 = vperm.slane %v1223, %v1230
          %v1232 = vrot.slane %v1195, 4
          %v1233 = vsel %vm1172, %v1232, %v1183
          %v1234 = vrot.slane %v1183, 4
          %v1235 = vsel %vm1172, %v1195, %v1234
          %v1237 = vunpack.c.l.s4 1934713408
          %v1238 = vunpack.c.0.s8 %v1237
          %v1239 = vperm.slane %v1233, %v1238
          %v1241 = vunpack.c.l.s4 1934713408
          %v1242 = vunpack.c.0.s8 %v1241
          %v1243 = vperm.slane %v1235, %v1242
          %v1244 = vrot.slane %v1215, 4
          %v1245 = vsel %vm1172, %v1244, %v1203
          %v1246 = vrot.slane %v1203, 4
          %v1247 = vsel %vm1172, %v1215, %v1246
          %v1249 = vunpack.c.l.s4 1934713408
          %v1250 = vunpack.c.0.s8 %v1249
          %v1251 = vperm.slane %v1245, %v1250
          %v1253 = vunpack.c.l.s4 1934713408
          %v1254 = vunpack.c.0.s8 %v1253
          %v1255 = vperm.slane %v1247, %v1254
          %v1256 = vrot.slane %v1219, 4
          %v1257 = vsel %vm1172, %v1256, %v1207
          %v1258 = vrot.slane %v1207, 4
          %v1259 = vsel %vm1172, %v1219, %v1258
          %v1261 = vunpack.c.l.s4 1934713408
          %v1262 = vunpack.c.0.s8 %v1261
          %v1263 = vperm.slane %v1257, %v1262
          %v1265 = vunpack.c.l.s4 1934713408
          %v1266 = vunpack.c.0.s8 %v1265
          %v1267 = vperm.slane %v1259, %v1266
          %v1268 = vrot.slane %v1251, 4
          %v1269 = vsel %vm1172, %v1268, %v1227
          %v1270 = vrot.slane %v1227, 4
          %v1271 = vsel %vm1172, %v1251, %v1270
          %v1272 = vrot.slane %v1255, 4
          %v1273 = vsel %vm1172, %v1272, %v1231
          %v1274 = vrot.slane %v1231, 4
          %v1275 = vsel %vm1172, %v1255, %v1274
          %v1276 = vrot.slane %v1263, 4
          %v1277 = vsel %vm1172, %v1276, %v1239
          %v1278 = vrot.slane %v1239, 4
          %v1279 = vsel %vm1172, %v1263, %v1278
          %v1280 = vrot.slane %v1267, 4
          %v1281 = vsel %vm1172, %v1280, %v1243
          %v1282 = vrot.slane %v1243, 4
          %v1283 = vsel %vm1172, %v1267, %v1282
          %v1284 = vrot.slane %v1138, 4
          %v1285 = vsel %vm1172, %v1284, %v1126
          %v1286 = vrot.slane %v1126, 4
          %v1287 = vsel %vm1172, %v1138, %v1286
          %v1289 = vunpack.c.l.s4 1983009808
          %v1290 = vunpack.c.0.s8 %v1289
          %v1291 = vperm.slane %v1285, %v1290
          %v1293 = vunpack.c.l.s4 1983009808
          %v1294 = vunpack.c.0.s8 %v1293
          %v1295 = vperm.slane %v1287, %v1294
          %v1296 = vrot.slane %v1144, 4
          %v1297 = vsel %vm1172, %v1296, %v1132
          %v1298 = vrot.slane %v1132, 4
          %v1299 = vsel %vm1172, %v1144, %v1298
          %v1301 = vunpack.c.l.s4 1983009808
          %v1302 = vunpack.c.0.s8 %v1301
          %v1303 = vperm.slane %v1297, %v1302
          %v1305 = vunpack.c.l.s4 1983009808
          %v1306 = vunpack.c.0.s8 %v1305
          %v1307 = vperm.slane %v1299, %v1306
          %v1308 = vrot.slane %v1162, 4
          %v1309 = vsel %vm1172, %v1308, %v1150
          %v1310 = vrot.slane %v1150, 4
          %v1311 = vsel %vm1172, %v1162, %v1310
          %v1313 = vunpack.c.l.s4 1983009808
          %v1314 = vunpack.c.0.s8 %v1313
          %v1315 = vperm.slane %v1309, %v1314
          %v1317 = vunpack.c.l.s4 1983009808
          %v1318 = vunpack.c.0.s8 %v1317
          %v1319 = vperm.slane %v1311, %v1318
          %v1320 = vrot.slane %v1168, 4
          %v1321 = vsel %vm1172, %v1320, %v1156
          %v1322 = vrot.slane %v1156, 4
          %v1323 = vsel %vm1172, %v1168, %v1322
          %v1325 = vunpack.c.l.s4 1983009808
          %v1326 = vunpack.c.0.s8 %v1325
          %v1327 = vperm.slane %v1321, %v1326
          %v1329 = vunpack.c.l.s4 1983009808
          %v1330 = vunpack.c.0.s8 %v1329
          %v1331 = vperm.slane %v1323, %v1330
          %v1332 = vrot.slane %v1303, 4
          %v1333 = vsel %vm1172, %v1332, %v1291
          %v1334 = vrot.slane %v1291, 4
          %v1335 = vsel %vm1172, %v1303, %v1334
          %v1337 = vunpack.c.l.s4 1934713408
          %v1338 = vunpack.c.0.s8 %v1337
          %v1339 = vperm.slane %v1333, %v1338
          %v1341 = vunpack.c.l.s4 1934713408
          %v1342 = vunpack.c.0.s8 %v1341
          %v1343 = vperm.slane %v1335, %v1342
          %v1344 = vrot.slane %v1307, 4
          %v1345 = vsel %vm1172, %v1344, %v1295
          %v1346 = vrot.slane %v1295, 4
          %v1347 = vsel %vm1172, %v1307, %v1346
          %v1349 = vunpack.c.l.s4 1934713408
          %v1350 = vunpack.c.0.s8 %v1349
          %v1351 = vperm.slane %v1345, %v1350
          %v1353 = vunpack.c.l.s4 1934713408
          %v1354 = vunpack.c.0.s8 %v1353
          %v1355 = vperm.slane %v1347, %v1354
          %v1356 = vrot.slane %v1327, 4
          %v1357 = vsel %vm1172, %v1356, %v1315
          %v1358 = vrot.slane %v1315, 4
          %v1359 = vsel %vm1172, %v1327, %v1358
          %v1361 = vunpack.c.l.s4 1934713408
          %v1362 = vunpack.c.0.s8 %v1361
          %v1363 = vperm.slane %v1357, %v1362
          %v1365 = vunpack.c.l.s4 1934713408
          %v1366 = vunpack.c.0.s8 %v1365
          %v1367 = vperm.slane %v1359, %v1366
          %v1368 = vrot.slane %v1331, 4
          %v1369 = vsel %vm1172, %v1368, %v1319
          %v1370 = vrot.slane %v1319, 4
          %v1371 = vsel %vm1172, %v1331, %v1370
          %v1373 = vunpack.c.l.s4 1934713408
          %v1374 = vunpack.c.0.s8 %v1373
          %v1375 = vperm.slane %v1369, %v1374
          %v1377 = vunpack.c.l.s4 1934713408
          %v1378 = vunpack.c.0.s8 %v1377
          %v1379 = vperm.slane %v1371, %v1378
          %v1380 = vrot.slane %v1363, 4
          %v1381 = vsel %vm1172, %v1380, %v1339
          %v1382 = vrot.slane %v1339, 4
          %v1383 = vsel %vm1172, %v1363, %v1382
          %v1384 = vrot.slane %v1367, 4
          %v1385 = vsel %vm1172, %v1384, %v1343
          %v1386 = vrot.slane %v1343, 4
          %v1387 = vsel %vm1172, %v1367, %v1386
          %v1388 = vrot.slane %v1375, 4
          %v1389 = vsel %vm1172, %v1388, %v1351
          %v1390 = vrot.slane %v1351, 4
          %v1391 = vsel %vm1172, %v1375, %v1390
          %v1392 = vrot.slane %v1379, 4
          %v1393 = vsel %vm1172, %v1392, %v1355
          %v1394 = vrot.slane %v1355, 4
          %v1395 = vsel %vm1172, %v1379, %v1394
          %vm1396 = vcmask 64512
          %v1397 = vsel %vm1396, %v1269, -inf
          %1398 = vmax.xlane.f32.xlu0 %v1397
          %v1399 = vpop.xlane.xlu0 %1398
          %v1400 = vsel %vm1396, %v1271, -inf
          %1401 = vmax.xlane.f32.xlu0 %v1400
          %v1402 = vpop.xlane.xlu0 %1401
          %v1403 = vsel %vm1396, %v1273, -inf
          %1404 = vmax.xlane.f32.xlu0 %v1403
          %v1405 = vpop.xlane.xlu0 %1404
          %v1406 = vsel %vm1396, %v1275, -inf
          %1407 = vmax.xlane.f32.xlu0 %v1406
          %v1408 = vpop.xlane.xlu0 %1407
          %v1409 = vsel %vm1396, %v1277, -inf
          %1410 = vmax.xlane.f32.xlu0 %v1409
          %v1411 = vpop.xlane.xlu0 %1410
          %v1412 = vsel %vm1396, %v1279, -inf
          %1413 = vmax.xlane.f32.xlu0 %v1412
          %v1414 = vpop.xlane.xlu0 %1413
          %v1415 = vsel %vm1396, %v1281, -inf
          %1416 = vmax.xlane.f32.xlu0 %v1415
          %v1417 = vpop.xlane.xlu0 %1416
          %v1418 = vsel %vm1396, %v1283, -inf
          %1419 = vmax.xlane.f32.xlu0 %v1418
          %v1420 = vpop.xlane.xlu0 %1419
          %v1421 = vsel %vm1396, %v1381, -inf
          %1422 = vmax.xlane.f32.xlu0 %v1421
          %v1423 = vpop.xlane.xlu0 %1422
          %v1424 = vsel %vm1396, %v1383, -inf
          %1425 = vmax.xlane.f32.xlu0 %v1424
          %v1426 = vpop.xlane.xlu0 %1425
          %v1427 = vsel %vm1396, %v1385, -inf
          %1428 = vmax.xlane.f32.xlu0 %v1427
          %v1429 = vpop.xlane.xlu0 %1428
          %v1430 = vsel %vm1396, %v1387, -inf
          %1431 = vmax.xlane.f32.xlu0 %v1430
          %v1432 = vpop.xlane.xlu0 %1431
          %v1433 = vsel %vm1396, %v1389, -inf
          %1434 = vmax.xlane.f32.xlu0 %v1433
          %v1435 = vpop.xlane.xlu0 %1434
          %v1436 = vsel %vm1396, %v1391, -inf
          %1437 = vmax.xlane.f32.xlu0 %v1436
          %v1438 = vpop.xlane.xlu0 %1437
          %v1439 = vsel %vm1396, %v1393, -inf
          %1440 = vmax.xlane.f32.xlu0 %v1439
          %v1441 = vpop.xlane.xlu0 %1440
          %v1442 = vsel %vm1396, %v1395, -inf
          %1443 = vmax.xlane.f32.xlu0 %v1442
          %v1444 = vpop.xlane.xlu0 %1443
          %v1445 = vsub.f32 %v1269, %v1399
          %v1446 = vsub.f32 %v1271, %v1402
          %v1447 = vsub.f32 %v1273, %v1405
          %v1448 = vsub.f32 %v1275, %v1408
          %v1449 = vsub.f32 %v1277, %v1411
          %v1450 = vsub.f32 %v1279, %v1414
          %v1451 = vsub.f32 %v1281, %v1417
          %v1452 = vsub.f32 %v1283, %v1420
          %v1453 = vsub.f32 %v1381, %v1423
          %v1454 = vsub.f32 %v1383, %v1426
          %v1455 = vsub.f32 %v1385, %v1429
          %v1456 = vsub.f32 %v1387, %v1432
          %v1457 = vsub.f32 %v1389, %v1435
          %v1458 = vsub.f32 %v1391, %v1438
          %v1459 = vsub.f32 %v1393, %v1441
          %v1460 = vsub.f32 %v1395, %v1444
          %v1461 = vmul.f32 %v1445, 1.442695
          %v1462 = vpow.pop %v1461
          %v1463 = vmul.f32 %v1446, 1.442695
          %v1464 = vpow.pop %v1463
          %v1465 = vmul.f32 %v1447, 1.442695
          %v1466 = vpow.pop %v1465
          %v1467 = vmul.f32 %v1448, 1.442695
          %v1468 = vpow.pop %v1467
          %v1469 = vmul.f32 %v1449, 1.442695
          %v1470 = vpow.pop %v1469
          %v1471 = vmul.f32 %v1450, 1.442695
          %v1472 = vpow.pop %v1471
          %v1473 = vmul.f32 %v1451, 1.442695
          %v1474 = vpow.pop %v1473
          %v1475 = vmul.f32 %v1452, 1.442695
          %v1476 = vpow.pop %v1475
          %v1477 = vmul.f32 %v1453, 1.442695
          %v1478 = vpow.pop %v1477
          %v1479 = vmul.f32 %v1454, 1.442695
          %v1480 = vpow.pop %v1479
          %v1481 = vmul.f32 %v1455, 1.442695
          %v1482 = vpow.pop %v1481
          %v1483 = vmul.f32 %v1456, 1.442695
          %v1484 = vpow.pop %v1483
          %v1485 = vmul.f32 %v1457, 1.442695
          %v1486 = vpow.pop %v1485
          %v1487 = vmul.f32 %v1458, 1.442695
          %v1488 = vpow.pop %v1487
          %v1489 = vmul.f32 %v1459, 1.442695
          %v1490 = vpow.pop %v1489
          %v1491 = vmul.f32 %v1460, 1.442695
          %v1492 = vpow.pop %v1491
          %v1493 = vsel %vm1396, %v1462, 0.0
          %1494 = vadd.xlane.f32.xlu0 %v1493
          %v1495 = vpop.xlane.xlu0 %1494
          %v1496 = vsel %vm1396, %v1464, 0.0
          %1497 = vadd.xlane.f32.xlu0 %v1496
          %v1498 = vpop.xlane.xlu0 %1497
          %v1499 = vsel %vm1396, %v1466, 0.0
          %1500 = vadd.xlane.f32.xlu0 %v1499
          %v1501 = vpop.xlane.xlu0 %1500
          %v1502 = vsel %vm1396, %v1468, 0.0
          %1503 = vadd.xlane.f32.xlu0 %v1502
          %v1504 = vpop.xlane.xlu0 %1503
          %v1505 = vsel %vm1396, %v1470, 0.0
          %1506 = vadd.xlane.f32.xlu0 %v1505
          %v1507 = vpop.xlane.xlu0 %1506
          %v1508 = vsel %vm1396, %v1472, 0.0
          %1509 = vadd.xlane.f32.xlu0 %v1508
          %v1510 = vpop.xlane.xlu0 %1509
          %v1511 = vsel %vm1396, %v1474, 0.0
          %1512 = vadd.xlane.f32.xlu0 %v1511
          %v1513 = vpop.xlane.xlu0 %1512
          %v1514 = vsel %vm1396, %v1476, 0.0
          %1515 = vadd.xlane.f32.xlu0 %v1514
          %v1516 = vpop.xlane.xlu0 %1515
          %v1517 = vsel %vm1396, %v1478, 0.0
          %1518 = vadd.xlane.f32.xlu0 %v1517
          %v1519 = vpop.xlane.xlu0 %1518
          %v1520 = vsel %vm1396, %v1480, 0.0
          %1521 = vadd.xlane.f32.xlu0 %v1520
          %v1522 = vpop.xlane.xlu0 %1521
          %v1523 = vsel %vm1396, %v1482, 0.0
          %1524 = vadd.xlane.f32.xlu0 %v1523
          %v1525 = vpop.xlane.xlu0 %1524
          %v1526 = vsel %vm1396, %v1484, 0.0
          %1527 = vadd.xlane.f32.xlu0 %v1526
          %v1528 = vpop.xlane.xlu0 %1527
          %v1529 = vsel %vm1396, %v1486, 0.0
          %1530 = vadd.xlane.f32.xlu0 %v1529
          %v1531 = vpop.xlane.xlu0 %1530
          %v1532 = vsel %vm1396, %v1488, 0.0
          %1533 = vadd.xlane.f32.xlu0 %v1532
          %v1534 = vpop.xlane.xlu0 %1533
          %v1535 = vsel %vm1396, %v1490, 0.0
          %1536 = vadd.xlane.f32.xlu0 %v1535
          %v1537 = vpop.xlane.xlu0 %1536
          %v1538 = vsel %vm1396, %v1492, 0.0
          %1539 = vadd.xlane.f32.xlu0 %v1538
          %v1540 = vpop.xlane.xlu0 %1539
          %v1541 = vrcp.pop %v1495
          %v1542 = vrcp.pop %v1498
          %v1543 = vrcp.pop %v1501
          %v1544 = vrcp.pop %v1504
          %v1545 = vrcp.pop %v1507
          %v1546 = vrcp.pop %v1510
          %v1547 = vrcp.pop %v1513
          %v1548 = vrcp.pop %v1516
          %v1549 = vrcp.pop %v1519
          %v1550 = vrcp.pop %v1522
          %v1551 = vrcp.pop %v1525
          %v1552 = vrcp.pop %v1528
          %v1553 = vrcp.pop %v1531
          %v1554 = vrcp.pop %v1534
          %v1555 = vrcp.pop %v1537
          %v1556 = vrcp.pop %v1540
          %v1557 = vmul.f32 %v1462, %v1541
          %v1558 = vmul.f32 %v1464, %v1542
          %v1559 = vmul.f32 %v1466, %v1543
          %v1560 = vmul.f32 %v1468, %v1544
          %v1561 = vmul.f32 %v1470, %v1545
          %v1562 = vmul.f32 %v1472, %v1546
          %v1563 = vmul.f32 %v1474, %v1547
          %v1564 = vmul.f32 %v1476, %v1548
          %v1565 = vmul.f32 %v1478, %v1549
          %v1566 = vmul.f32 %v1480, %v1550
          %v1567 = vmul.f32 %v1482, %v1551
          %v1568 = vmul.f32 %v1484, %v1552
          %v1569 = vmul.f32 %v1486, %v1553
          %v1570 = vmul.f32 %v1488, %v1554
          %v1571 = vmul.f32 %v1490, %v1555
          %v1572 = vmul.f32 %v1492, %v1556
          %v1573 = vrot.slane %v1559, 4
          %v1574 = vsel %vm1172, %v1573, %v1557
          %v1575 = vrot.slane %v1557, 4
          %v1576 = vsel %vm1172, %v1559, %v1575
          %v1578 = vunpack.c.l.s4 1983009808
          %v1579 = vunpack.c.0.s8 %v1578
          %v1580 = vperm.slane %v1574, %v1579
          %v1582 = vunpack.c.l.s4 1983009808
          %v1583 = vunpack.c.0.s8 %v1582
          %v1584 = vperm.slane %v1576, %v1583
          %v1585 = vrot.slane %v1560, 4
          %v1586 = vsel %vm1172, %v1585, %v1558
          %v1587 = vrot.slane %v1558, 4
          %v1588 = vsel %vm1172, %v1560, %v1587
          %v1590 = vunpack.c.l.s4 1983009808
          %v1591 = vunpack.c.0.s8 %v1590
          %v1592 = vperm.slane %v1586, %v1591
          %v1594 = vunpack.c.l.s4 1983009808
          %v1595 = vunpack.c.0.s8 %v1594
          %v1596 = vperm.slane %v1588, %v1595
          %v1597 = vrot.slane %v1563, 4
          %v1598 = vsel %vm1172, %v1597, %v1561
          %v1599 = vrot.slane %v1561, 4
          %v1600 = vsel %vm1172, %v1563, %v1599
          %v1602 = vunpack.c.l.s4 1983009808
          %v1603 = vunpack.c.0.s8 %v1602
          %v1604 = vperm.slane %v1598, %v1603
          %v1606 = vunpack.c.l.s4 1983009808
          %v1607 = vunpack.c.0.s8 %v1606
          %v1608 = vperm.slane %v1600, %v1607
          %v1609 = vrot.slane %v1564, 4
          %v1610 = vsel %vm1172, %v1609, %v1562
          %v1611 = vrot.slane %v1562, 4
          %v1612 = vsel %vm1172, %v1564, %v1611
          %v1614 = vunpack.c.l.s4 1983009808
          %v1615 = vunpack.c.0.s8 %v1614
          %v1616 = vperm.slane %v1610, %v1615
          %v1618 = vunpack.c.l.s4 1983009808
          %v1619 = vunpack.c.0.s8 %v1618
          %v1620 = vperm.slane %v1612, %v1619
          %v1621 = vrot.slane %v1592, 4
          %v1622 = vsel %vm1172, %v1621, %v1580
          %v1623 = vrot.slane %v1580, 4
          %v1624 = vsel %vm1172, %v1592, %v1623
          %v1626 = vunpack.c.l.s4 1934713408
          %v1627 = vunpack.c.0.s8 %v1626
          %v1628 = vperm.slane %v1622, %v1627
          %v1630 = vunpack.c.l.s4 1934713408
          %v1631 = vunpack.c.0.s8 %v1630
          %v1632 = vperm.slane %v1624, %v1631
          %v1633 = vrot.slane %v1596, 4
          %v1634 = vsel %vm1172, %v1633, %v1584
          %v1635 = vrot.slane %v1584, 4
          %v1636 = vsel %vm1172, %v1596, %v1635
          %v1638 = vunpack.c.l.s4 1934713408
          %v1639 = vunpack.c.0.s8 %v1638
          %v1640 = vperm.slane %v1634, %v1639
          %v1642 = vunpack.c.l.s4 1934713408
          %v1643 = vunpack.c.0.s8 %v1642
          %v1644 = vperm.slane %v1636, %v1643
          %v1645 = vrot.slane %v1616, 4
          %v1646 = vsel %vm1172, %v1645, %v1604
          %v1647 = vrot.slane %v1604, 4
          %v1648 = vsel %vm1172, %v1616, %v1647
          %v1650 = vunpack.c.l.s4 1934713408
          %v1651 = vunpack.c.0.s8 %v1650
          %v1652 = vperm.slane %v1646, %v1651
          %v1654 = vunpack.c.l.s4 1934713408
          %v1655 = vunpack.c.0.s8 %v1654
          %v1656 = vperm.slane %v1648, %v1655
          %v1657 = vrot.slane %v1620, 4
          %v1658 = vsel %vm1172, %v1657, %v1608
          %v1659 = vrot.slane %v1608, 4
          %v1660 = vsel %vm1172, %v1620, %v1659
          %v1662 = vunpack.c.l.s4 1934713408
          %v1663 = vunpack.c.0.s8 %v1662
          %v1664 = vperm.slane %v1658, %v1663
          %v1666 = vunpack.c.l.s4 1934713408
          %v1667 = vunpack.c.0.s8 %v1666
          %v1668 = vperm.slane %v1660, %v1667
          %v1669 = vrot.slane %v1652, 4
          %v1670 = vsel %vm1172, %v1669, %v1628
          %v1671 = vrot.slane %v1628, 4
          %v1672 = vsel %vm1172, %v1652, %v1671
          %v1673 = vrot.slane %v1656, 4
          %v1674 = vsel %vm1172, %v1673, %v1632
          %v1675 = vrot.slane %v1632, 4
          %v1676 = vsel %vm1172, %v1656, %v1675
          %v1677 = vrot.slane %v1664, 4
          %v1678 = vsel %vm1172, %v1677, %v1640
          %v1679 = vrot.slane %v1640, 4
          %v1680 = vsel %vm1172, %v1664, %v1679
          %v1681 = vrot.slane %v1668, 4
          %v1682 = vsel %vm1172, %v1681, %v1644
          %v1683 = vrot.slane %v1644, 4
          %v1684 = vsel %vm1172, %v1668, %v1683
          %v1685 = vrot.slane %v1567, 4
          %v1686 = vsel %vm1172, %v1685, %v1565
          %v1687 = vrot.slane %v1565, 4
          %v1688 = vsel %vm1172, %v1567, %v1687
          %v1690 = vunpack.c.l.s4 1983009808
          %v1691 = vunpack.c.0.s8 %v1690
          %v1692 = vperm.slane %v1686, %v1691
          %v1694 = vunpack.c.l.s4 1983009808
          %v1695 = vunpack.c.0.s8 %v1694
          %v1696 = vperm.slane %v1688, %v1695
          %v1697 = vrot.slane %v1568, 4
          %v1698 = vsel %vm1172, %v1697, %v1566
          %v1699 = vrot.slane %v1566, 4
          %v1700 = vsel %vm1172, %v1568, %v1699
          %v1702 = vunpack.c.l.s4 1983009808
          %v1703 = vunpack.c.0.s8 %v1702
          %v1704 = vperm.slane %v1698, %v1703
          %v1706 = vunpack.c.l.s4 1983009808
          %v1707 = vunpack.c.0.s8 %v1706
          %v1708 = vperm.slane %v1700, %v1707
          %v1709 = vrot.slane %v1571, 4
          %v1710 = vsel %vm1172, %v1709, %v1569
          %v1711 = vrot.slane %v1569, 4
          %v1712 = vsel %vm1172, %v1571, %v1711
          %v1714 = vunpack.c.l.s4 1983009808
          %v1715 = vunpack.c.0.s8 %v1714
          %v1716 = vperm.slane %v1710, %v1715
          %v1718 = vunpack.c.l.s4 1983009808
          %v1719 = vunpack.c.0.s8 %v1718
          %v1720 = vperm.slane %v1712, %v1719
          %v1721 = vrot.slane %v1572, 4
          %v1722 = vsel %vm1172, %v1721, %v1570
          %v1723 = vrot.slane %v1570, 4
          %v1724 = vsel %vm1172, %v1572, %v1723
          %v1726 = vunpack.c.l.s4 1983009808
          %v1727 = vunpack.c.0.s8 %v1726
          %v1728 = vperm.slane %v1722, %v1727
          %v1730 = vunpack.c.l.s4 1983009808
          %v1731 = vunpack.c.0.s8 %v1730
          %v1732 = vperm.slane %v1724, %v1731
          %v1733 = vrot.slane %v1704, 4
          %v1734 = vsel %vm1172, %v1733, %v1692
          %v1735 = vrot.slane %v1692, 4
          %v1736 = vsel %vm1172, %v1704, %v1735
          %v1738 = vunpack.c.l.s4 1934713408
          %v1739 = vunpack.c.0.s8 %v1738
          %v1740 = vperm.slane %v1734, %v1739
          %v1742 = vunpack.c.l.s4 1934713408
          %v1743 = vunpack.c.0.s8 %v1742
          %v1744 = vperm.slane %v1736, %v1743
          %v1745 = vrot.slane %v1708, 4
          %v1746 = vsel %vm1172, %v1745, %v1696
          %v1747 = vrot.slane %v1696, 4
          %v1748 = vsel %vm1172, %v1708, %v1747
          %v1750 = vunpack.c.l.s4 1934713408
          %v1751 = vunpack.c.0.s8 %v1750
          %v1752 = vperm.slane %v1746, %v1751
          %v1754 = vunpack.c.l.s4 1934713408
          %v1755 = vunpack.c.0.s8 %v1754
          %v1756 = vperm.slane %v1748, %v1755
          %v1757 = vrot.slane %v1728, 4
          %v1758 = vsel %vm1172, %v1757, %v1716
          %v1759 = vrot.slane %v1716, 4
          %v1760 = vsel %vm1172, %v1728, %v1759
          %v1762 = vunpack.c.l.s4 1934713408
          %v1763 = vunpack.c.0.s8 %v1762
          %v1764 = vperm.slane %v1758, %v1763
          %v1766 = vunpack.c.l.s4 1934713408
          %v1767 = vunpack.c.0.s8 %v1766
          %v1768 = vperm.slane %v1760, %v1767
          %v1769 = vrot.slane %v1732, 4
          %v1770 = vsel %vm1172, %v1769, %v1720
          %v1771 = vrot.slane %v1720, 4
          %v1772 = vsel %vm1172, %v1732, %v1771
          %v1774 = vunpack.c.l.s4 1934713408
          %v1775 = vunpack.c.0.s8 %v1774
          %v1776 = vperm.slane %v1770, %v1775
          %v1778 = vunpack.c.l.s4 1934713408
          %v1779 = vunpack.c.0.s8 %v1778
          %v1780 = vperm.slane %v1772, %v1779
          %v1781 = vrot.slane %v1764, 4
          %v1782 = vsel %vm1172, %v1781, %v1740
          %v1783 = vrot.slane %v1740, 4
          %v1784 = vsel %vm1172, %v1764, %v1783
          %v1785 = vrot.slane %v1768, 4
          %v1786 = vsel %vm1172, %v1785, %v1744
          %v1787 = vrot.slane %v1744, 4
          %v1788 = vsel %vm1172, %v1768, %v1787
          %v1789 = vrot.slane %v1776, 4
          %v1790 = vsel %vm1172, %v1789, %v1752
          %v1791 = vrot.slane %v1752, 4
          %v1792 = vsel %vm1172, %v1776, %v1791
          %v1793 = vrot.slane %v1780, 4
          %v1794 = vsel %vm1172, %v1793, %v1756
          %v1795 = vrot.slane %v1756, 4
          %v1796 = vsel %vm1172, %v1780, %v1795
          %1799 = vrot.lane.b32.xlu0 %v1672, 8
          %v1800 = vpop.permute.xlu0 %1799
          %1801 = vrot.lane.b32.xlu0 %v1784, 8
          %v1802 = vpop.permute.xlu0 %1801
          %1807 = vrot.lane.b32.xlu0 %v1674, 16
          %v1808 = vpop.permute.xlu0 %1807
          %1809 = vrot.lane.b32.xlu0 %v1786, 16
          %v1810 = vpop.permute.xlu0 %1809
          %1815 = vrot.lane.b32.xlu0 %v1676, 24
          %v1816 = vpop.permute.xlu0 %1815
          %1817 = vrot.lane.b32.xlu0 %v1788, 24
          %v1818 = vpop.permute.xlu0 %1817
          %1823 = vrot.lane.b32.xlu0 %v1678, 32
          %v1824 = vpop.permute.xlu0 %1823
          %1825 = vrot.lane.b32.xlu0 %v1790, 32
          %v1826 = vpop.permute.xlu0 %1825
          %1831 = vrot.lane.b32.xlu0 %v1680, 40
          %v1832 = vpop.permute.xlu0 %1831
          %1833 = vrot.lane.b32.xlu0 %v1792, 40
          %v1834 = vpop.permute.xlu0 %1833
          %1839 = vrot.lane.b32.xlu0 %v1682, 48
          %v1840 = vpop.permute.xlu0 %1839
          %1841 = vrot.lane.b32.xlu0 %v1794, 48
          %v1842 = vpop.permute.xlu0 %1841
          %1847 = vrot.lane.b32.xlu0 %v1684, 56
          %v1848 = vpop.permute.xlu0 %1847
          %1849 = vrot.lane.b32.xlu0 %v1796, 56
          %v1850 = vpop.permute.xlu0 %1849
          %v1853 = vsel %vm1396, %v1670, %v1800
          %v1854 = vsel %vm1396, %v1782, %v1802
          %vm1855 = vcmask 130048
          %v1856 = vsel %vm1855, %v1853, %v1808
          %v1857 = vsel %vm1855, %v1854, %v1810
          %vm1858 = vcmask 195584
          %v1859 = vsel %vm1858, %v1856, %v1816
          %v1860 = vsel %vm1858, %v1857, %v1818
          %vm1861 = vcmask 261120
          %v1862 = vsel %vm1861, %v1859, %v1824
          %v1863 = vsel %vm1861, %v1860, %v1826
          %vm1864 = vcmask 326656
          %v1865 = vsel %vm1864, %v1862, %v1832
          %v1866 = vsel %vm1864, %v1863, %v1834
          %vm1867 = vcmask 392192
          %v1868 = vsel %vm1867, %v1865, %v1840
          %v1869 = vsel %vm1867, %v1866, %v1842
          %vm1870 = vcmask 457728
          %v1871 = vsel %vm1870, %v1868, %v1848
          %v1872 = vsel %vm1870, %v1869, %v1850
          %v1873 = vpack.c.bf16 %v1871, %v1871
          %v1874 = vpack.c.bf16 %v1872, %v1872
          %v1883 = vunpack.c.l.b16 %v1033
          %v1884 = vunpack.c.l.b16 %v1034
          %v1885 = vunpack.c.l.b16 %v1035
          %v1886 = vunpack.c.l.b16 %v1036
          %v1887 = vunpack.c.l.b16 %v1037
          %v1888 = vunpack.c.l.b16 %v1038
          %v1889 = vunpack.c.l.b16 %v1039
          %v1890 = vunpack.c.l.b16 %v1040
          %v1891 = vpack.c.b16 %v1884, %v1883
          %v1892 = vpack.c.b16 %v1886, %v1885
          %v1893 = vpack.c.b16 %v1888, %v1887
          %v1894 = vpack.c.b16 %v1890, %v1889
          %vm1899 = vcmask 523264
          %v1901 = vsel %vm1899, %v1873, 0
          %1903 = vmatpush.bf16.msra.mxu0 0
          %1904 = vmatpush.bf16.msra.mxu0 0
          %1905 = vmatpush.bf16.msra.mxu0 0
          %1906 = vmatpush.bf16.msra.mxu0 0
          %1907 = vmatpush.bf16.msra.mxu0 %v1894
          %1908 = vmatpush.bf16.msra.mxu0 %v1893
          %1909 = vmatpush.bf16.msra.mxu0 %v1892
          %1910 = vmatpush.bf16.msra.mxu0 %v1891
          %1911 = vmatmul.bf16.gmra.mxu0 %v1901
          %v1912 = vpop.f32.mrf.mxu0
          %v1913 = vadd.f32 0.0, %v1912
          %v1914 = vpop.f32.mrf.mxu0
          %1915 = vdwg.mxu0
          %v1924 = vunpack.c.l.b16 %v1041
          %v1925 = vunpack.c.l.b16 %v1042
          %v1926 = vunpack.c.l.b16 %v1043
          %v1927 = vunpack.c.l.b16 %v1044
          %v1928 = vunpack.c.l.b16 %v1045
          %v1929 = vunpack.c.l.b16 %v1046
          %v1930 = vunpack.c.l.b16 %v1047
          %v1931 = vunpack.c.l.b16 %v1048
          %v1932 = vpack.c.b16 %v1925, %v1924
          %v1933 = vpack.c.b16 %v1927, %v1926
          %v1934 = vpack.c.b16 %v1929, %v1928
          %v1935 = vpack.c.b16 %v1931, %v1930
          %v1941 = vsel %vm1899, %v1874, 0
          %1943 = vmatpush.bf16.msra.mxu0 0
          %1944 = vmatpush.bf16.msra.mxu0 0
          %1945 = vmatpush.bf16.msra.mxu0 0
          %1946 = vmatpush.bf16.msra.mxu0 0
          %1947 = vmatpush.bf16.msra.mxu0 %v1935
          %1948 = vmatpush.bf16.msra.mxu0 %v1934
          %1949 = vmatpush.bf16.msra.mxu0 %v1933
          %1950 = vmatpush.bf16.msra.mxu0 %v1932
          %1951 = vmatmul.bf16.gmra.mxu0 %v1941
          %v1952 = vpop.f32.mrf.mxu0
          %v1953 = vadd.f32 0.0, %v1952
          %v1954 = vpop.f32.mrf.mxu0
          %1955 = vdwg.mxu0
          %v1956 = vpack.c.bf16 %v1953, %v1913
          %v1957 = vld [vmem:[%s703] sm:$0xf]
          %v1958 = vld [vmem:[%s703 + $0x4] sm:$0xf]
          %v1959 = vld [vmem:[%s703 + $0x8] sm:$0xf]
          %v1960 = vld [vmem:[%s703 + $0xc] sm:$0xf]
          %v1961 = vld [vmem:[%s703 + $0x10] sm:$0xf]
          %v1962 = vld [vmem:[%s703 + $0x14] sm:$0xf]
          %v1963 = vld [vmem:[%s703 + $0x18] sm:$0xf]
          %v1964 = vld [vmem:[%s703 + $0x1c] sm:$0xf]
          %v1965 = vld [vmem:[%s703 + $0x20] sm:$0xf]
          %v1966 = vld [vmem:[%s703 + $0x24] sm:$0xf]
          %v1967 = vld [vmem:[%s703 + $0x28] sm:$0xf]
          %v1968 = vld [vmem:[%s703 + $0x2c] sm:$0xf]
          %v1969 = vld [vmem:[%s703 + $0x30] sm:$0xf]
          %v1970 = vld [vmem:[%s703 + $0x34] sm:$0xf]
          %v1971 = vld [vmem:[%s703 + $0x38] sm:$0xf]
          %v1972 = vld [vmem:[%s703 + $0x3c] sm:$0xf]
          %v1973 = vld [vmem:[%s706] sm:$0x1]
          %v1975 = vperm.slane %v1973, 0
          %v1993 = vunpack.c.l.b16 %v1957
          %v1994 = vunpack.c.l.b16 %v1958
          %v1995 = vunpack.c.l.b16 %v1959
          %v1996 = vunpack.c.l.b16 %v1960
          %v1997 = vunpack.c.l.b16 %v1961
          %v1998 = vunpack.c.l.b16 %v1962
          %v1999 = vunpack.c.l.b16 %v1963
          %v2000 = vunpack.c.l.b16 %v1964
          %v2001 = vunpack.c.l.b16 %v1965
          %v2002 = vunpack.c.l.b16 %v1966
          %v2003 = vunpack.c.l.b16 %v1967
          %v2004 = vunpack.c.l.b16 %v1968
          %v2005 = vunpack.c.l.b16 %v1969
          %v2006 = vunpack.c.l.b16 %v1970
          %v2007 = vunpack.c.l.b16 %v1971
          %v2008 = vunpack.c.l.b16 %v1972
          %v2009 = vpack.c.b16 %v1994, %v1993
          %v2010 = vpack.c.b16 %v1996, %v1995
          %v2011 = vpack.c.b16 %v1998, %v1997
          %v2012 = vpack.c.b16 %v2000, %v1999
          %v2013 = vpack.c.b16 %v2002, %v2001
          %v2014 = vpack.c.b16 %v2004, %v2003
          %v2015 = vpack.c.b16 %v2006, %v2005
          %v2016 = vpack.c.b16 %v2008, %v2007
          %2025 = vmatpush.bf16.msra.mxu0 %v2016
          %2026 = vmatpush.bf16.msra.mxu0 %v2015
          %2027 = vmatpush.bf16.msra.mxu0 %v2014
          %2028 = vmatpush.bf16.msra.mxu0 %v2013
          %2029 = vmatpush.bf16.msra.mxu0 %v2012
          %2030 = vmatpush.bf16.msra.mxu0 %v2011
          %2031 = vmatpush.bf16.msra.mxu0 %v2010
          %2032 = vmatpush.bf16.msra.mxu0 %v2009
          %2033 = vmatmul.bf16.gmra.mxu0 %v1956
          %v2034 = vpop.f32.mrf.mxu0
          %v2035 = vadd.f32 %v1975, %v2034
          %v2036 = vpop.f32.mrf.mxu0
          %v2037 = vadd.f32 %v1975, %v2036
          %2038 = vdwg.mxu0
          %v2039 = vadd.f32 %v747, %v2035
          %v2040 = vadd.f32 %v748, %v2037
          %v2041 = vld [vmem:[%s709] sm:$0x1]
          %v2042 = vld [vmem:[%s712] sm:$0x1]
          %2043 = vadd.xlane.f32.xlu0 %v2039
          %v2044 = vpop.xlane.xlu0 %2043
          %2045 = vadd.xlane.f32.xlu0 %v2040
          %v2046 = vpop.xlane.xlu0 %2045
          %v2047 = vrcp.pop 128.0
          %v2048 = vmul.f32 128.0, %v2047
          %v2049 = vsub.f32 1.0, %v2048
          %v2050 = vmul.f32 %v2047, %v2049
          %v2051 = vadd.f32 %v2047, %v2050
          %vm2052 = vweird.f32 %v2047
          %v2053 = vsel %vm2052, %v2047, %v2051
          %v2054 = vmul.f32 %v2044, %v2053
          %v2055 = vmul.f32 %v2046, %v2053
          %v2056 = vsub.f32 %v2039, %v2054
          %v2057 = vsub.f32 %v2040, %v2055
          %v2058 = vmul.f32 %v2056, %v2056
          %v2059 = vmul.f32 %v2057, %v2057
          %2060 = vadd.xlane.f32.xlu0 %v2058
          %v2061 = vpop.xlane.xlu0 %2060
          %2062 = vadd.xlane.f32.xlu0 %v2059
          %v2063 = vpop.xlane.xlu0 %2062
          %v2064 = vmul.f32 %v2061, %v2053
          %v2065 = vmul.f32 %v2063, %v2053
          %v2066 = vadd.f32 %v2064, 1e-05
          %v2067 = vadd.f32 %v2065, 1e-05
          %v2068 = vrsqrt.pop %v2066
          %v2069 = vmul.f32 %v2068, %v2066
          %v2070 = vmul.f32 %v2069, %v2068
          %v2071 = vmul.f32 0.5, %v2070
          %v2072 = vsub.f32 1.5, %v2071
          %v2073 = vmul.f32 %v2068, %v2072
          %vm2074 = vweird.f32 %v2066
          %vm2075 = vweird.f32 %v2068
          %vm2076 = vmor %vm2074, %vm2075
          %v2077 = vsel %vm2076, %v2068, %v2073
          %v2078 = vrsqrt.pop %v2067
          %v2079 = vmul.f32 %v2078, %v2067
          %v2080 = vmul.f32 %v2079, %v2078
          %v2081 = vmul.f32 0.5, %v2080
          %v2082 = vsub.f32 1.5, %v2081
          %v2083 = vmul.f32 %v2078, %v2082
          %vm2084 = vweird.f32 %v2067
          %vm2085 = vweird.f32 %v2078
          %vm2086 = vmor %vm2084, %vm2085
          %v2087 = vsel %vm2086, %v2078, %v2083
          %v2088 = vmul.f32 %v2056, %v2077
          %v2089 = vmul.f32 %v2057, %v2087
          %v2091 = vperm.slane %v2041, 0
          %v2093 = vmul.f32 %v2088, %v2091
          %v2094 = vmul.f32 %v2089, %v2091
          %v2096 = vperm.slane %v2042, 0
          %v2098 = vadd.f32 %v2093, %v2096
          %v2099 = vadd.f32 %v2094, %v2096
          %2100 = vst [vmem:[#allocation2] sm:$0xff] %v2098
          %2101 = vst [vmem:[#allocation2 + $0x8] sm:$0xff] %v2099
          %2102 = vst [vmem:[#allocation3] sm:$0xff] 0.0
          %2103 = vst [vmem:[#allocation3 + $0x8] sm:$0xff] 0.0
        $region96: #{entity_represent_forward.1} parent=75 // pred_fallthru
          _
        %v2104 = vld [vmem:[#allocation2] sm:$0xff]
        %v2105 = vld [vmem:[#allocation2 + $0x8] sm:$0xff]
        %v2106 = vpack.c.bf16 %v2105, %v2104
        %v2107 = vld [vmem:[%s599] sm:$0xff]
        %v2108 = vld [vmem:[%s599 + $0x8] sm:$0xff]
        %v2109 = vld [vmem:[%s599 + $0x10] sm:$0xff]
        %v2110 = vld [vmem:[%s599 + $0x18] sm:$0xff]
        %v2111 = vld [vmem:[%s599 + $0x20] sm:$0xff]
        %v2112 = vld [vmem:[%s599 + $0x28] sm:$0xff]
        %v2113 = vld [vmem:[%s599 + $0x30] sm:$0xff]
        %v2114 = vld [vmem:[%s599 + $0x38] sm:$0xff]
        %v2115 = vld [vmem:[%s599 + $0x40] sm:$0xff]
        %v2116 = vld [vmem:[%s599 + $0x48] sm:$0xff]
        %v2117 = vld [vmem:[%s599 + $0x50] sm:$0xff]
        %v2118 = vld [vmem:[%s599 + $0x58] sm:$0xff]
        %v2119 = vld [vmem:[%s599 + $0x60] sm:$0xff]
        %v2120 = vld [vmem:[%s599 + $0x68] sm:$0xff]
        %v2121 = vld [vmem:[%s599 + $0x70] sm:$0xff]
        %v2122 = vld [vmem:[%s599 + $0x78] sm:$0xff]
        %v2123 = vld [vmem:[%s599 + $0x80] sm:$0xff]
        %v2124 = vld [vmem:[%s599 + $0x88] sm:$0xff]
        %v2125 = vld [vmem:[%s599 + $0x90] sm:$0xff]
        %v2126 = vld [vmem:[%s599 + $0x98] sm:$0xff]
        %v2127 = vld [vmem:[%s599 + $0xa0] sm:$0xff]
        %v2128 = vld [vmem:[%s599 + $0xa8] sm:$0xff]
        %v2129 = vld [vmem:[%s599 + $0xb0] sm:$0xff]
        %v2130 = vld [vmem:[%s599 + $0xb8] sm:$0xff]
        %v2131 = vld [vmem:[%s599 + $0xc0] sm:$0xff]
        %v2132 = vld [vmem:[%s599 + $0xc8] sm:$0xff]
        %v2133 = vld [vmem:[%s599 + $0xd0] sm:$0xff]
        %v2134 = vld [vmem:[%s599 + $0xd8] sm:$0xff]
        %v2135 = vld [vmem:[%s599 + $0xe0] sm:$0xff]
        %v2136 = vld [vmem:[%s599 + $0xe8] sm:$0xff]
        %v2137 = vld [vmem:[%s599 + $0xf0] sm:$0xff]
        %v2138 = vld [vmem:[%s599 + $0xf8] sm:$0xff]
        %v2139 = vld [vmem:[%s721] sm:$0xf]
        %v2141 = vperm.slane %v2139, 0
        %v2142 = vperm.slane %v2139, 1
        %v2143 = vperm.slane %v2139, 2
        %v2144 = vperm.slane %v2139, 3
        %v2181 = vunpack.c.l.b16 %v2107
        %v2182 = vunpack.c.h.b16 %v2107
        %v2183 = vunpack.c.l.b16 %v2108
        %v2184 = vunpack.c.h.b16 %v2108
        %v2185 = vunpack.c.l.b16 %v2109
        %v2186 = vunpack.c.h.b16 %v2109
        %v2187 = vunpack.c.l.b16 %v2110
        %v2188 = vunpack.c.h.b16 %v2110
        %v2189 = vunpack.c.l.b16 %v2111
        %v2190 = vunpack.c.h.b16 %v2111
        %v2191 = vunpack.c.l.b16 %v2112
        %v2192 = vunpack.c.h.b16 %v2112
        %v2193 = vunpack.c.l.b16 %v2113
        %v2194 = vunpack.c.h.b16 %v2113
        %v2195 = vunpack.c.l.b16 %v2114
        %v2196 = vunpack.c.h.b16 %v2114
        %v2197 = vunpack.c.l.b16 %v2115
        %v2198 = vunpack.c.h.b16 %v2115
        %v2199 = vunpack.c.l.b16 %v2116
        %v2200 = vunpack.c.h.b16 %v2116
        %v2201 = vunpack.c.l.b16 %v2117
        %v2202 = vunpack.c.h.b16 %v2117
        %v2203 = vunpack.c.l.b16 %v2118
        %v2204 = vunpack.c.h.b16 %v2118
        %v2205 = vunpack.c.l.b16 %v2119
        %v2206 = vunpack.c.h.b16 %v2119
        %v2207 = vunpack.c.l.b16 %v2120
        %v2208 = vunpack.c.h.b16 %v2120
        %v2209 = vunpack.c.l.b16 %v2121
        %v2210 = vunpack.c.h.b16 %v2121
        %v2211 = vunpack.c.l.b16 %v2122
        %v2212 = vunpack.c.h.b16 %v2122
        %v2213 = vunpack.c.l.b16 %v2123
        %v2214 = vunpack.c.h.b16 %v2123
        %v2215 = vunpack.c.l.b16 %v2124
        %v2216 = vunpack.c.h.b16 %v2124
        %v2217 = vunpack.c.l.b16 %v2125
        %v2218 = vunpack.c.h.b16 %v2125
        %v2219 = vunpack.c.l.b16 %v2126
        %v2220 = vunpack.c.h.b16 %v2126
        %v2221 = vunpack.c.l.b16 %v2127
        %v2222 = vunpack.c.h.b16 %v2127
        %v2223 = vunpack.c.l.b16 %v2128
        %v2224 = vunpack.c.h.b16 %v2128
        %v2225 = vunpack.c.l.b16 %v2129
        %v2226 = vunpack.c.h.b16 %v2129
        %v2227 = vunpack.c.l.b16 %v2130
        %v2228 = vunpack.c.h.b16 %v2130
        %v2229 = vunpack.c.l.b16 %v2131
        %v2230 = vunpack.c.h.b16 %v2131
        %v2231 = vunpack.c.l.b16 %v2132
        %v2232 = vunpack.c.h.b16 %v2132
        %v2233 = vunpack.c.l.b16 %v2133
        %v2234 = vunpack.c.h.b16 %v2133
        %v2235 = vunpack.c.l.b16 %v2134
        %v2236 = vunpack.c.h.b16 %v2134
        %v2237 = vunpack.c.l.b16 %v2135
        %v2238 = vunpack.c.h.b16 %v2135
        %v2239 = vunpack.c.l.b16 %v2136
        %v2240 = vunpack.c.h.b16 %v2136
        %v2241 = vunpack.c.l.b16 %v2137
        %v2242 = vunpack.c.h.b16 %v2137
        %v2243 = vunpack.c.l.b16 %v2138
        %v2244 = vunpack.c.h.b16 %v2138
        %v2245 = vpack.c.b16 %v2185, %v2181
        %v2246 = vpack.c.b16 %v2186, %v2182
        %v2247 = vpack.c.b16 %v2187, %v2183
        %v2248 = vpack.c.b16 %v2188, %v2184
        %v2249 = vpack.c.b16 %v2193, %v2189
        %v2250 = vpack.c.b16 %v2194, %v2190
        %v2251 = vpack.c.b16 %v2195, %v2191
        %v2252 = vpack.c.b16 %v2196, %v2192
        %v2253 = vpack.c.b16 %v2201, %v2197
        %v2254 = vpack.c.b16 %v2202, %v2198
        %v2255 = vpack.c.b16 %v2203, %v2199
        %v2256 = vpack.c.b16 %v2204, %v2200
        %v2257 = vpack.c.b16 %v2209, %v2205
        %v2258 = vpack.c.b16 %v2210, %v2206
        %v2259 = vpack.c.b16 %v2211, %v2207
        %v2260 = vpack.c.b16 %v2212, %v2208
        %v2261 = vpack.c.b16 %v2217, %v2213
        %v2262 = vpack.c.b16 %v2218, %v2214
        %v2263 = vpack.c.b16 %v2219, %v2215
        %v2264 = vpack.c.b16 %v2220, %v2216
        %v2265 = vpack.c.b16 %v2225, %v2221
        %v2266 = vpack.c.b16 %v2226, %v2222
        %v2267 = vpack.c.b16 %v2227, %v2223
        %v2268 = vpack.c.b16 %v2228, %v2224
        %v2269 = vpack.c.b16 %v2233, %v2229
        %v2270 = vpack.c.b16 %v2234, %v2230
        %v2271 = vpack.c.b16 %v2235, %v2231
        %v2272 = vpack.c.b16 %v2236, %v2232
        %v2273 = vpack.c.b16 %v2241, %v2237
        %v2274 = vpack.c.b16 %v2242, %v2238
        %v2275 = vpack.c.b16 %v2243, %v2239
        %v2276 = vpack.c.b16 %v2244, %v2240
        %2309 = vmatpush.bf16.msra.mxu0 %v2273
        %2310 = vmatpush.bf16.msra.mxu0 %v2269
        %2311 = vmatpush.bf16.msra.mxu0 %v2265
        %2312 = vmatpush.bf16.msra.mxu0 %v2261
        %2313 = vmatpush.bf16.msra.mxu0 %v2257
        %2314 = vmatpush.bf16.msra.mxu0 %v2253
        %2315 = vmatpush.bf16.msra.mxu0 %v2249
        %2316 = vmatpush.bf16.msra.mxu0 %v2245
        %2317 = vmatmul.bf16.gmra.mxu0 %v2106
        %v2318 = vpop.f32.mrf.mxu0
        %v2319 = vadd.f32 %v2141, %v2318
        %v2320 = vpop.f32.mrf.mxu0
        %v2321 = vadd.f32 %v2141, %v2320
        %2322 = vdwg.mxu0
        %2323 = vmatpush.bf16.msra.mxu0 %v2274
        %2324 = vmatpush.bf16.msra.mxu0 %v2270
        %2325 = vmatpush.bf16.msra.mxu0 %v2266
        %2326 = vmatpush.bf16.msra.mxu0 %v2262
        %2327 = vmatpush.bf16.msra.mxu0 %v2258
        %2328 = vmatpush.bf16.msra.mxu0 %v2254
        %2329 = vmatpush.bf16.msra.mxu0 %v2250
        %2330 = vmatpush.bf16.msra.mxu0 %v2246
        %2331 = vmatmul.bf16.gmra.mxu0 %v2106
        %v2332 = vpop.f32.mrf.mxu0
        %v2333 = vadd.f32 %v2142, %v2332
        %v2334 = vpop.f32.mrf.mxu0
        %v2335 = vadd.f32 %v2142, %v2334
        %2336 = vdwg.mxu0
        %2337 = vmatpush.bf16.msra.mxu0 %v2275
        %2338 = vmatpush.bf16.msra.mxu0 %v2271
        %2339 = vmatpush.bf16.msra.mxu0 %v2267
        %2340 = vmatpush.bf16.msra.mxu0 %v2263
        %2341 = vmatpush.bf16.msra.mxu0 %v2259
        %2342 = vmatpush.bf16.msra.mxu0 %v2255
        %2343 = vmatpush.bf16.msra.mxu0 %v2251
        %2344 = vmatpush.bf16.msra.mxu0 %v2247
        %2345 = vmatmul.bf16.gmra.mxu0 %v2106
        %v2346 = vpop.f32.mrf.mxu0
        %v2347 = vadd.f32 %v2143, %v2346
        %v2348 = vpop.f32.mrf.mxu0
        %v2349 = vadd.f32 %v2143, %v2348
        %2350 = vdwg.mxu0
        %2351 = vmatpush.bf16.msra.mxu0 %v2276
        %2352 = vmatpush.bf16.msra.mxu0 %v2272
        %2353 = vmatpush.bf16.msra.mxu0 %v2268
        %2354 = vmatpush.bf16.msra.mxu0 %v2264
        %2355 = vmatpush.bf16.msra.mxu0 %v2260
        %2356 = vmatpush.bf16.msra.mxu0 %v2256
        %2357 = vmatpush.bf16.msra.mxu0 %v2252
        %2358 = vmatpush.bf16.msra.mxu0 %v2248
        %2359 = vmatmul.bf16.gmra.mxu0 %v2106
        %v2360 = vpop.f32.mrf.mxu0
        %v2361 = vadd.f32 %v2144, %v2360
        %v2362 = vpop.f32.mrf.mxu0
        %v2363 = vadd.f32 %v2144, %v2362
        %2364 = vdwg.mxu0
        %v2365 = vmax.f32 %v2319, 0.0
        %v2366 = vmax.f32 %v2333, 0.0
        %v2367 = vmax.f32 %v2347, 0.0
        %v2368 = vmax.f32 %v2361, 0.0
        %v2369 = vmax.f32 %v2321, 0.0
        %v2370 = vmax.f32 %v2335, 0.0
        %v2371 = vmax.f32 %v2349, 0.0
        %v2372 = vmax.f32 %v2363, 0.0
        %v2373 = vld [vmem:[#allocation3] sm:$0xff]
        %v2374 = vld [vmem:[#allocation3 + $0x8] sm:$0xff]
        %v2375 = vpack.c.bf16 %v2369, %v2365
        %v2376 = vpack.c.bf16 %v2370, %v2366
        %v2377 = vpack.c.bf16 %v2371, %v2367
        %v2378 = vpack.c.bf16 %v2372, %v2368
        %v2379 = vld [vmem:[%s609] sm:$0xf]
        %v2380 = vld [vmem:[%s609 + $0x4] sm:$0xf]
        %v2381 = vld [vmem:[%s609 + $0x8] sm:$0xf]
        %v2382 = vld [vmem:[%s609 + $0xc] sm:$0xf]
        %v2383 = vld [vmem:[%s609 + $0x10] sm:$0xf]
        %v2384 = vld [vmem:[%s609 + $0x14] sm:$0xf]
        %v2385 = vld [vmem:[%s609 + $0x18] sm:$0xf]
        %v2386 = vld [vmem:[%s609 + $0x1c] sm:$0xf]
        %v2387 = vld [vmem:[%s609 + $0x20] sm:$0xf]
        %v2388 = vld [vmem:[%s609 + $0x24] sm:$0xf]
        %v2389 = vld [vmem:[%s609 + $0x28] sm:$0xf]
        %v2390 = vld [vmem:[%s609 + $0x2c] sm:$0xf]
        %v2391 = vld [vmem:[%s609 + $0x30] sm:$0xf]
        %v2392 = vld [vmem:[%s609 + $0x34] sm:$0xf]
        %v2393 = vld [vmem:[%s609 + $0x38] sm:$0xf]
        %v2394 = vld [vmem:[%s609 + $0x3c] sm:$0xf]
        %v2395 = vld [vmem:[%s609 + $0x40] sm:$0xf]
        %v2396 = vld [vmem:[%s609 + $0x44] sm:$0xf]
        %v2397 = vld [vmem:[%s609 + $0x48] sm:$0xf]
        %v2398 = vld [vmem:[%s609 + $0x4c] sm:$0xf]
        %v2399 = vld [vmem:[%s609 + $0x50] sm:$0xf]
        %v2400 = vld [vmem:[%s609 + $0x54] sm:$0xf]
        %v2401 = vld [vmem:[%s609 + $0x58] sm:$0xf]
        %v2402 = vld [vmem:[%s609 + $0x5c] sm:$0xf]
        %v2403 = vld [vmem:[%s609 + $0x60] sm:$0xf]
        %v2404 = vld [vmem:[%s609 + $0x64] sm:$0xf]
        %v2405 = vld [vmem:[%s609 + $0x68] sm:$0xf]
        %v2406 = vld [vmem:[%s609 + $0x6c] sm:$0xf]
        %v2407 = vld [vmem:[%s609 + $0x70] sm:$0xf]
        %v2408 = vld [vmem:[%s609 + $0x74] sm:$0xf]
        %v2409 = vld [vmem:[%s609 + $0x78] sm:$0xf]
        %v2410 = vld [vmem:[%s609 + $0x7c] sm:$0xf]
        %v2411 = vld [vmem:[%s609 + $0x80] sm:$0xf]
        %v2412 = vld [vmem:[%s609 + $0x84] sm:$0xf]
        %v2413 = vld [vmem:[%s609 + $0x88] sm:$0xf]
        %v2414 = vld [vmem:[%s609 + $0x8c] sm:$0xf]
        %v2415 = vld [vmem:[%s609 + $0x90] sm:$0xf]
        %v2416 = vld [vmem:[%s609 + $0x94] sm:$0xf]
        %v2417 = vld [vmem:[%s609 + $0x98] sm:$0xf]
        %v2418 = vld [vmem:[%s609 + $0x9c] sm:$0xf]
        %v2419 = vld [vmem:[%s609 + $0xa0] sm:$0xf]
        %v2420 = vld [vmem:[%s609 + $0xa4] sm:$0xf]
        %v2421 = vld [vmem:[%s609 + $0xa8] sm:$0xf]
        %v2422 = vld [vmem:[%s609 + $0xac] sm:$0xf]
        %v2423 = vld [vmem:[%s609 + $0xb0] sm:$0xf]
        %v2424 = vld [vmem:[%s609 + $0xb4] sm:$0xf]
        %v2425 = vld [vmem:[%s609 + $0xb8] sm:$0xf]
        %v2426 = vld [vmem:[%s609 + $0xbc] sm:$0xf]
        %v2427 = vld [vmem:[%s609 + $0xc0] sm:$0xf]
        %v2428 = vld [vmem:[%s609 + $0xc4] sm:$0xf]
        %v2429 = vld [vmem:[%s609 + $0xc8] sm:$0xf]
        %v2430 = vld [vmem:[%s609 + $0xcc] sm:$0xf]
        %v2431 = vld [vmem:[%s609 + $0xd0] sm:$0xf]
        %v2432 = vld [vmem:[%s609 + $0xd4] sm:$0xf]
        %v2433 = vld [vmem:[%s609 + $0xd8] sm:$0xf]
        %v2434 = vld [vmem:[%s609 + $0xdc] sm:$0xf]
        %v2435 = vld [vmem:[%s609 + $0xe0] sm:$0xf]
        %v2436 = vld [vmem:[%s609 + $0xe4] sm:$0xf]
        %v2437 = vld [vmem:[%s609 + $0xe8] sm:$0xf]
        %v2438 = vld [vmem:[%s609 + $0xec] sm:$0xf]
        %v2439 = vld [vmem:[%s609 + $0xf0] sm:$0xf]
        %v2440 = vld [vmem:[%s609 + $0xf4] sm:$0xf]
        %v2441 = vld [vmem:[%s609 + $0xf8] sm:$0xf]
        %v2442 = vld [vmem:[%s609 + $0xfc] sm:$0xf]
        %v2507 = vunpack.c.l.b16 %v2379
        %v2508 = vunpack.c.l.b16 %v2380
        %v2509 = vunpack.c.l.b16 %v2381
        %v2510 = vunpack.c.l.b16 %v2382
        %v2511 = vunpack.c.l.b16 %v2383
        %v2512 = vunpack.c.l.b16 %v2384
        %v2513 = vunpack.c.l.b16 %v2385
        %v2514 = vunpack.c.l.b16 %v2386
        %v2515 = vunpack.c.l.b16 %v2387
        %v2516 = vunpack.c.l.b16 %v2388
        %v2517 = vunpack.c.l.b16 %v2389
        %v2518 = vunpack.c.l.b16 %v2390
        %v2519 = vunpack.c.l.b16 %v2391
        %v2520 = vunpack.c.l.b16 %v2392
        %v2521 = vunpack.c.l.b16 %v2393
        %v2522 = vunpack.c.l.b16 %v2394
        %v2523 = vunpack.c.l.b16 %v2395
        %v2524 = vunpack.c.l.b16 %v2396
        %v2525 = vunpack.c.l.b16 %v2397
        %v2526 = vunpack.c.l.b16 %v2398
        %v2527 = vunpack.c.l.b16 %v2399
        %v2528 = vunpack.c.l.b16 %v2400
        %v2529 = vunpack.c.l.b16 %v2401
        %v2530 = vunpack.c.l.b16 %v2402
        %v2531 = vunpack.c.l.b16 %v2403
        %v2532 = vunpack.c.l.b16 %v2404
        %v2533 = vunpack.c.l.b16 %v2405
        %v2534 = vunpack.c.l.b16 %v2406
        %v2535 = vunpack.c.l.b16 %v2407
        %v2536 = vunpack.c.l.b16 %v2408
        %v2537 = vunpack.c.l.b16 %v2409
        %v2538 = vunpack.c.l.b16 %v2410
        %v2539 = vunpack.c.l.b16 %v2411
        %v2540 = vunpack.c.l.b16 %v2412
        %v2541 = vunpack.c.l.b16 %v2413
        %v2542 = vunpack.c.l.b16 %v2414
        %v2543 = vunpack.c.l.b16 %v2415
        %v2544 = vunpack.c.l.b16 %v2416
        %v2545 = vunpack.c.l.b16 %v2417
        %v2546 = vunpack.c.l.b16 %v2418
        %v2547 = vunpack.c.l.b16 %v2419
        %v2548 = vunpack.c.l.b16 %v2420
        %v2549 = vunpack.c.l.b16 %v2421
        %v2550 = vunpack.c.l.b16 %v2422
        %v2551 = vunpack.c.l.b16 %v2423
        %v2552 = vunpack.c.l.b16 %v2424
        %v2553 = vunpack.c.l.b16 %v2425
        %v2554 = vunpack.c.l.b16 %v2426
        %v2555 = vunpack.c.l.b16 %v2427
        %v2556 = vunpack.c.l.b16 %v2428
        %v2557 = vunpack.c.l.b16 %v2429
        %v2558 = vunpack.c.l.b16 %v2430
        %v2559 = vunpack.c.l.b16 %v2431
        %v2560 = vunpack.c.l.b16 %v2432
        %v2561 = vunpack.c.l.b16 %v2433
        %v2562 = vunpack.c.l.b16 %v2434
        %v2563 = vunpack.c.l.b16 %v2435
        %v2564 = vunpack.c.l.b16 %v2436
        %v2565 = vunpack.c.l.b16 %v2437
        %v2566 = vunpack.c.l.b16 %v2438
        %v2567 = vunpack.c.l.b16 %v2439
        %v2568 = vunpack.c.l.b16 %v2440
        %v2569 = vunpack.c.l.b16 %v2441
        %v2570 = vunpack.c.l.b16 %v2442
        %v2571 = vpack.c.b16 %v2508, %v2507
        %v2572 = vpack.c.b16 %v2510, %v2509
        %v2573 = vpack.c.b16 %v2512, %v2511
        %v2574 = vpack.c.b16 %v2514, %v2513
        %v2575 = vpack.c.b16 %v2516, %v2515
        %v2576 = vpack.c.b16 %v2518, %v2517
        %v2577 = vpack.c.b16 %v2520, %v2519
        %v2578 = vpack.c.b16 %v2522, %v2521
        %v2579 = vpack.c.b16 %v2524, %v2523
        %v2580 = vpack.c.b16 %v2526, %v2525
        %v2581 = vpack.c.b16 %v2528, %v2527
        %v2582 = vpack.c.b16 %v2530, %v2529
        %v2583 = vpack.c.b16 %v2532, %v2531
        %v2584 = vpack.c.b16 %v2534, %v2533
        %v2585 = vpack.c.b16 %v2536, %v2535
        %v2586 = vpack.c.b16 %v2538, %v2537
        %v2587 = vpack.c.b16 %v2540, %v2539
        %v2588 = vpack.c.b16 %v2542, %v2541
        %v2589 = vpack.c.b16 %v2544, %v2543
        %v2590 = vpack.c.b16 %v2546, %v2545
        %v2591 = vpack.c.b16 %v2548, %v2547
        %v2592 = vpack.c.b16 %v2550, %v2549
        %v2593 = vpack.c.b16 %v2552, %v2551
        %v2594 = vpack.c.b16 %v2554, %v2553
        %v2595 = vpack.c.b16 %v2556, %v2555
        %v2596 = vpack.c.b16 %v2558, %v2557
        %v2597 = vpack.c.b16 %v2560, %v2559
        %v2598 = vpack.c.b16 %v2562, %v2561
        %v2599 = vpack.c.b16 %v2564, %v2563
        %v2600 = vpack.c.b16 %v2566, %v2565
        %v2601 = vpack.c.b16 %v2568, %v2567
        %v2602 = vpack.c.b16 %v2570, %v2569
        %2635 = vmatpush.bf16.msra.mxu0 %v2578
        %2636 = vmatpush.bf16.msra.mxu0 %v2577
        %2637 = vmatpush.bf16.msra.mxu0 %v2576
        %2638 = vmatpush.bf16.msra.mxu0 %v2575
        %2639 = vmatpush.bf16.msra.mxu0 %v2574
        %2640 = vmatpush.bf16.msra.mxu0 %v2573
        %2641 = vmatpush.bf16.msra.mxu0 %v2572
        %2642 = vmatpush.bf16.msra.mxu0 %v2571
        %2643 = vmatmul.bf16.gmra.mxu0 %v2375
        %v2644 = vpop.f32.mrf.mxu0
        %v2645 = vadd.f32 0.0, %v2644
        %v2646 = vpop.f32.mrf.mxu0
        %v2647 = vadd.f32 0.0, %v2646
        %2648 = vdwg.mxu0
        %2649 = vmatpush.bf16.msra.mxu0 %v2586
        %2650 = vmatpush.bf16.msra.mxu0 %v2585
        %2651 = vmatpush.bf16.msra.mxu0 %v2584
        %2652 = vmatpush.bf16.msra.mxu0 %v2583
        %2653 = vmatpush.bf16.msra.mxu0 %v2582
        %2654 = vmatpush.bf16.msra.mxu0 %v2581
        %2655 = vmatpush.bf16.msra.mxu0 %v2580
        %2656 = vmatpush.bf16.msra.mxu0 %v2579
        %2657 = vmatmul.bf16.gmra.mxu0 %v2376
        %v2658 = vpop.f32.mrf.mxu0
        %v2659 = vadd.f32 %v2645, %v2658
        %v2660 = vpop.f32.mrf.mxu0
        %v2661 = vadd.f32 %v2647, %v2660
        %2662 = vdwg.mxu0
        %2663 = vmatpush.bf16.msra.mxu0 %v2594
        %2664 = vmatpush.bf16.msra.mxu0 %v2593
        %2665 = vmatpush.bf16.msra.mxu0 %v2592
        %2666 = vmatpush.bf16.msra.mxu0 %v2591
        %2667 = vmatpush.bf16.msra.mxu0 %v2590
        %2668 = vmatpush.bf16.msra.mxu0 %v2589
        %2669 = vmatpush.bf16.msra.mxu0 %v2588
        %2670 = vmatpush.bf16.msra.mxu0 %v2587
        %2671 = vmatmul.bf16.gmra.mxu0 %v2377
        %v2672 = vpop.f32.mrf.mxu0
        %v2673 = vadd.f32 %v2659, %v2672
        %v2674 = vpop.f32.mrf.mxu0
        %v2675 = vadd.f32 %v2661, %v2674
        %2676 = vdwg.mxu0
        %2677 = vmatpush.bf16.msra.mxu0 %v2602
        %2678 = vmatpush.bf16.msra.mxu0 %v2601
        %2679 = vmatpush.bf16.msra.mxu0 %v2600
        %2680 = vmatpush.bf16.msra.mxu0 %v2599
        %2681 = vmatpush.bf16.msra.mxu0 %v2598
        %2682 = vmatpush.bf16.msra.mxu0 %v2597
        %2683 = vmatpush.bf16.msra.mxu0 %v2596
        %2684 = vmatpush.bf16.msra.mxu0 %v2595
        %2685 = vmatmul.bf16.gmra.mxu0 %v2378
        %v2686 = vpop.f32.mrf.mxu0
        %v2687 = vadd.f32 %v2673, %v2686
        %v2688 = vpop.f32.mrf.mxu0
        %v2689 = vadd.f32 %v2675, %v2688
        %2690 = vdwg.mxu0
        %v2691 = vadd.f32 %v2373, %v2687
        %v2692 = vadd.f32 %v2374, %v2689
        %2693 = vst [vmem:[#allocation3] sm:$0xff] %v2691
        %2694 = vst [vmem:[#allocation3 + $0x8] sm:$0xff] %v2692
        %p2695 = scmp.eq.s32.totalorder %s37, 3
        // Predicated region
        $region97: #{entity_represent_forward.1} parent=75 // pred_check
          %p2696 = pneg %p2695
        $region98: #{entity_represent_forward.1} parent=75 // pred_check_branch
          %2698 = sbr.rel (%p2696) target = $region100
        $region99: #{entity_represent_forward.1} parent=75 // pred_region
          %v2699 = vld [vmem:[#allocation3] sm:$0xff]
          %v2700 = vld [vmem:[#allocation3 + $0x8] sm:$0xff]
          %v2701 = vadd.f32 %v2104, %v2699
          %v2702 = vadd.f32 %v2105, %v2700
          %v2703 = vld [vmem:[%s726] sm:$0x1]
          %v2705 = vperm.slane %v2703, 0
          %v2707 = vadd.f32 %v2701, %v2705
          %v2708 = vadd.f32 %v2702, %v2705
          %v2709 = vld [vmem:[%s729] sm:$0x1]
          %v2710 = vld [vmem:[%s732] sm:$0x1]
          %2711 = vadd.xlane.f32.xlu0 %v2707
          %v2712 = vpop.xlane.xlu0 %2711
          %2713 = vadd.xlane.f32.xlu0 %v2708
          %v2714 = vpop.xlane.xlu0 %2713
          %v2715 = vrcp.pop 128.0
          %v2716 = vmul.f32 128.0, %v2715
          %v2717 = vsub.f32 1.0, %v2716
          %v2718 = vmul.f32 %v2715, %v2717
          %v2719 = vadd.f32 %v2715, %v2718
          %vm2720 = vweird.f32 %v2715
          %v2721 = vsel %vm2720, %v2715, %v2719
          %v2722 = vmul.f32 %v2712, %v2721
          %v2723 = vmul.f32 %v2714, %v2721
          %v2724 = vsub.f32 %v2707, %v2722
          %v2725 = vsub.f32 %v2708, %v2723
          %v2726 = vmul.f32 %v2724, %v2724
          %v2727 = vmul.f32 %v2725, %v2725
          %2728 = vadd.xlane.f32.xlu0 %v2726
          %v2729 = vpop.xlane.xlu0 %2728
          %2730 = vadd.xlane.f32.xlu0 %v2727
          %v2731 = vpop.xlane.xlu0 %2730
          %v2732 = vmul.f32 %v2729, %v2721
          %v2733 = vmul.f32 %v2731, %v2721
          %v2734 = vadd.f32 %v2732, 1e-05
          %v2735 = vadd.f32 %v2733, 1e-05
          %v2736 = vrsqrt.pop %v2734
          %v2737 = vmul.f32 %v2736, %v2734
          %v2738 = vmul.f32 %v2737, %v2736
          %v2739 = vmul.f32 0.5, %v2738
          %v2740 = vsub.f32 1.5, %v2739
          %v2741 = vmul.f32 %v2736, %v2740
          %vm2742 = vweird.f32 %v2734
          %vm2743 = vweird.f32 %v2736
          %vm2744 = vmor %vm2742, %vm2743
          %v2745 = vsel %vm2744, %v2736, %v2741
          %v2746 = vrsqrt.pop %v2735
          %v2747 = vmul.f32 %v2746, %v2735
          %v2748 = vmul.f32 %v2747, %v2746
          %v2749 = vmul.f32 0.5, %v2748
          %v2750 = vsub.f32 1.5, %v2749
          %v2751 = vmul.f32 %v2746, %v2750
          %vm2752 = vweird.f32 %v2735
          %vm2753 = vweird.f32 %v2746
          %vm2754 = vmor %vm2752, %vm2753
          %v2755 = vsel %vm2754, %v2746, %v2751
          %v2756 = vmul.f32 %v2724, %v2745
          %v2757 = vmul.f32 %v2725, %v2755
          %v2759 = vperm.slane %v2709, 0
          %v2761 = vmul.f32 %v2756, %v2759
          %v2762 = vmul.f32 %v2757, %v2759
          %v2764 = vperm.slane %v2710, 0
          %v2766 = vadd.f32 %v2761, %v2764
          %v2767 = vadd.f32 %v2762, %v2764
          %2768 = vst [vmem:[#allocation2] sm:$0xff] %v2766
          %2769 = vst [vmem:[#allocation2 + $0x8] sm:$0xff] %v2767
        $region100: #{entity_represent_forward.1} parent=75 // pred_fallthru
          _
        %p2770 = scmp.eq.s32.totalorder %s36, 1
        %p2771 = pnand %p2695, %p2770
        %p2772 = pneg %p2771
        // Predicated region
        $region101: #{entity_represent_forward.1} parent=75 // pred_check
          _
        $region102: #{entity_represent_forward.1} parent=75 // pred_check_branch
          %2774 = sbr.rel (%p2771) target = $region104
        $region103: #{entity_represent_forward.1} parent=75 // pred_region
          %v2775 = vld [vmem:[#allocation2] sm:$0xff]
          %v2776 = vld [vmem:[#allocation2 + $0x8] sm:$0xff]
          %v2779 = vrot.slane %v2776, 7
          %vm2780 = vcmask 1041409
          %v2781 = vsel %vm2780, %v2779, %v2775
          %2783 = vst [vmem:[#allocation10] sm:$0x3] %v2781
        $region104: #{entity_represent_forward.1} parent=75 // pred_fallthru
          _
        // Predicated region
        $region105: #{entity_represent_forward.1} parent=75 // pred_check
          %p2784 = pneg %p417
        $region106: #{entity_represent_forward.1} parent=75 // pred_check_branch
          %2786 = sbr.rel (%p2784) target = $region108
        $region107: #{entity_represent_forward.1} parent=75 // pred_region
          %2788 = vsyncadd [#allocation6], 0
          %s2790 = sshll.u32 [#allocation10], 4
          %s2791 = int_to_ptr.vmem [resolvable:$true] %s2790
          %s2792 = sshll.u32 %s14, 4
          %s2793 = int_to_ptr.hbm [resolvable:$true] %s2792
          %2795 = dma.vmem_to_hbm [thread:$0]  %s2791, 32, %s2793, [#allocation6]
        $region108: #{entity_represent_forward.1} parent=75 // pred_fallthru
          _
        // Predicated region
        $region109: #{entity_represent_forward.1} parent=75 // pred_check
          %p2796 = pneg %p417
        $region110: #{entity_represent_forward.1} parent=75 // pred_check_branch
          %2798 = sbr.rel (%p2796) target = $region112
        $region111: #{entity_represent_forward.1} parent=75 // pred_region
          %2800 = dma.done [#allocation6], 32
        $region112: #{entity_represent_forward.1} parent=75 // pred_fallthru
          _
      $region76: #{entity_represent_forward.1} parent=5 // pred_fallthru
        _
      %p2801 = scmp.le.s32.totalorder 2, %s27
      // Predicated region
      $region113: #{entity_represent_forward.1} parent=5 // pred_check
        %p2802 = pneg %p2801
      $region114: #{entity_represent_forward.1} parent=5 // pred_check_branch
        %2804 = sbr.rel (%p2802) target = $region116
      $region115: #{entity_represent_forward.1} parent=5 // pred_region
        %s2805 = ssub.s32 %s27, 2
      $region116: #{entity_represent_forward.1} parent=5 // pred_fallthru
        _
    $region6: #{entity_represent_forward.1} parent=1 // loop_footer
      %s31 = sadd.s32 1, %s27
    $region7: #{entity_represent_forward.1} parent=1 // loop_footer_branch
      %26 = sbr.rel target = $region3
    $region8: #{entity_represent_forward.1} parent=1 // loop_exit
      _
    %2806 = vsyncpa [#allocation5], 1
    %s2807 = scalar_lea.sflag [#allocation5], 1
    %2808 = vsyncpa %s2807, 1
    %2809 = vsyncpa [#allocation8], 1
    %s2810 = scalar_lea.sflag [#allocation8], 1
    %2811 = vsyncpa %s2810, 1
    %2812 = vsyncpa [#allocation6], 1
    %s2813 = scalar_lea.sflag [#allocation6], 1
    %2814 = vsyncpa %s2813, 1

</llo_original>
